<compile_context>
chip_gen: v7x
topology: tpu7x:2x2x1
jax: 0.10.0
libtpu: 0.0.40
codegen_flags: <defaults>
</compile_context>

<pallas_src>
import math

import jax
import jax.numpy as jnp
from jax.experimental import pallas as pl
from jax.experimental.pallas import tpu as pltpu

LN_EPS = 1e-5  # nn.LayerNorm default eps

# Row layout of the packed (16, H) vector-parameter array.
_VEC_ORDER = ("bs", "gs", "bes",          # state embedding
              "ba", "ga", "bea",          # action embedding
              "bf1", "gf1", "bef1",       # fusion layer 1
              "bf2", "gf2", "bef2",       # fusion layer 2
              "bo1", "go1", "beo1",       # output layer 1
              "bo2")                      # output layer 2
# Slab layout of the packed (5, H, H) square-weight array.
_WSQ_ORDER = ("wf1s", "wf1a", "wf2", "wo1", "wo2")


# ------------------------------- fused kernel ---------------------------------
def _encoder_kernel(state_ref, action_ref, ws_ref, wa_ref, wsq_ref, vec_ref,
                    out_ref):
    """Whole SimpleEncoder forward for one batch tile, entirely in VMEM."""

    def row(i):                                   # (1, H) f32 bias/gamma/beta
        return vec_ref[i:i + 1, :]

    def mm(x, w_bf16):                            # MXU: bf16 x bf16 -> f32 acc
        return jnp.dot(x.astype(jnp.bfloat16), w_bf16,
                       preferred_element_type=jnp.float32)

    def ln(y, g_idx, b_idx):
        # Single-pass statistics: mean and E[x^2] are independent reductions.
        mu = jnp.mean(y, axis=-1, keepdims=True)
        m2 = jnp.mean(y * y, axis=-1, keepdims=True)
        var = m2 - mu * mu
        return (y - mu) * jax.lax.rsqrt(var + LN_EPS) * row(g_idx) + row(b_idx)

    def relu(y):
        return jnp.maximum(y, 0.0)

    # state / action embeddings: ReLU(LN(x @ W + b))
    s = relu(ln(mm(state_ref[...], ws_ref[...]) + row(0), 1, 2))
    a = relu(ln(mm(action_ref[...], wa_ref[...]) + row(3), 4, 5))

    # fusion layer 1: cat([s, a], -1) @ Wf1  ==  s @ Wf1[:H] + a @ Wf1[H:]
    f = relu(ln(mm(s, wsq_ref[0]) + mm(a, wsq_ref[1]) + row(6), 7, 8))
    # fusion layer 2
    f = relu(ln(mm(f, wsq_ref[2]) + row(9), 10, 11))
    # output layer 1
    o = relu(ln(mm(f, wsq_ref[3]) + row(12), 13, 14))
    # output layer 2 (plain Linear, no LN / activation)
    out_ref[...] = mm(o, wsq_ref[4]) + row(15)


# ------------------------------- wrapper ---------------------------------------
def _pick_block_b(batch: int) -> int:
    """Batch tile: full batch when tiny; >=2 grid steps once B>=16 (megacore);
    up to 1024-row tiles for large batches."""
    if batch < 16:
        return batch
    blk = ((pl.cdiv(batch, 2) + 7) // 8) * 8
    return min(blk, 1024)


def _call_encoder(packed, state, action, *, single_buffer: bool):
    B, S = state.shape
    A = action.shape[1]
    H = packed["vec"].shape[1]
    block_b = _pick_block_b(B)
    grid = (pl.cdiv(B, block_b),)

    def act_spec(feat):
        return pl.BlockSpec((block_b, feat), lambda i: (i, 0))

    def par_spec(shape):
        zero = (0,) * len(shape)
        if single_buffer:
            # Constant index_map -> never re-DMAs; one buffer is enough.
            return pl.BlockSpec(shape, lambda i: zero,
                                pipeline_mode=pl.Buffered(1))
        return pl.BlockSpec(shape, lambda i: zero)

    plist = [packed["ws"], packed["wa"], packed["wsq"], packed["vec"]]
    in_specs = [act_spec(S), act_spec(A)] + [par_spec(p.shape) for p in plist]

    # VMEM budget: resident params (x2 worst case if double-buffered) +
    # double-buffered streamed activation tiles + headroom for compiler scratch.
    bytes_params = sum(int(p.size) * p.dtype.itemsize for p in plist)
    bytes_stream = block_b * 4 * (S + A + H)
    vmem_limit = int(min(2 * bytes_params + 2 * bytes_stream + (8 << 20),
                         48 << 20))

    return pl.pallas_call(
        _encoder_kernel,
        out_shape=jax.ShapeDtypeStruct((B, H), jnp.float32),
        grid=grid,
        in_specs=in_specs,
        out_specs=act_spec(H),
        compiler_params=pltpu.CompilerParams(
            dimension_semantics=("parallel",),
            vmem_limit_bytes=vmem_limit),
    )(state, action, *plist)


_SINGLE_BUFFER_PARAMS = None  # None = not probed yet, else True / False


def simple_encoder_forward(packed, state, action):
    """SimpleEncoder.forward(state, action) with continuous=True (packed params)."""
    # TODO(synk): discrete-action path (nn.Embedding lookup + LayerNorm, no ReLU)
    # is not implemented; only the continuous branch is translated.
    global _SINGLE_BUFFER_PARAMS
    B = state.shape[0]
    state = state.astype(jnp.float32)
    action = action.reshape(B, -1).astype(jnp.float32)

    if _SINGLE_BUFFER_PARAMS is None:
        try:
            out = _call_encoder(packed, state, action, single_buffer=True)
            out = jax.block_until_ready(out)
            _SINGLE_BUFFER_PARAMS = True
            return out
        except Exception:
            # This JAX build rejects single-buffered resident params; fall back.
            _SINGLE_BUFFER_PARAMS = False
    return _call_encoder(packed, state, action,
                         single_buffer=_SINGLE_BUFFER_PARAMS)


# ------------------------------- parameter init / packing ----------------------
def _uniform_fan_in(key, shape, fan_in):
    lim = 1.0 / math.sqrt(fan_in)
    return jax.random.uniform(key, shape, jnp.float32, -lim, lim)


def init_params(key, *, state_dim, action_dim, hidden_dim):
    """Parameters matching SimpleEncoder(continuous=True); weights stored (in, out)."""
    H = hidden_dim
    keys = iter(jax.random.split(key, 32))

    def lin(din, dout, prefix):
        return {f"w{prefix}": _uniform_fan_in(next(keys), (din, dout), din),
                f"b{prefix}": _uniform_fan_in(next(keys), (1, dout), din)}

    def ln(dout, prefix):
        return {f"g{prefix}": jnp.ones((1, dout), jnp.float32),
                f"be{prefix}": jnp.zeros((1, dout), jnp.float32)}

    p = {}
    p.update(lin(state_dim, H, "s"));  p.update(ln(H, "s"))
    p.update(lin(action_dim, H, "a")); p.update(ln(H, "a"))
    # fusion layer 1 weight pre-split to fold the concat into two matmuls
    wf1 = _uniform_fan_in(next(keys), (2 * H, H), 2 * H)
    p["wf1s"], p["wf1a"] = wf1[:H], wf1[H:]
    p["bf1"] = _uniform_fan_in(next(keys), (1, H), 2 * H)
    p.update(ln(H, "f1"))
    p.update(lin(H, H, "f2")); p.update(ln(H, "f2"))
    p.update(lin(H, H, "o1")); p.update(ln(H, "o1"))
    p.update(lin(H, H, "o2"))                 # final Linear: no LN / activation
    return p


def pack_params(p):
    """Pack the f32 param dict into the kernel's 4 resident arrays."""
    wsq = jnp.stack([p[k] for k in _WSQ_ORDER]).astype(jnp.bfloat16)   # (5,H,H)
    vec = jnp.concatenate([p[k] for k in _VEC_ORDER], axis=0)          # (16,H) f32
    return {"ws": p["ws"].astype(jnp.bfloat16),
            "wa": p["wa"].astype(jnp.bfloat16),
            "wsq": wsq,
            "vec": vec.astype(jnp.float32)}


# ------------------------------- pure-JAX reference -----------------------------
def _ref_forward(params, state, action):
    def ln(y, g, b):
        mu = y.mean(-1, keepdims=True)
        var = ((y - mu) ** 2).mean(-1, keepdims=True)
        return (y - mu) / jnp.sqrt(var + LN_EPS) * g + b

    B = state.shape[0]
    action = action.reshape(B, -1)
    s = jnp.maximum(ln(state @ params["ws"] + params["bs"],
                       params["gs"], params["bes"]), 0.0)
    a = jnp.maximum(ln(action @ params["wa"] + params["ba"],
                       params["ga"], params["bea"]), 0.0)
    wf1 = jnp.concatenate([params["wf1s"], params["wf1a"]], axis=0)
    comb = jnp.concatenate([s, a], axis=-1)
    f = jnp.maximum(ln(comb @ wf1 + params["bf1"],
                       params["gf1"], params["bef1"]), 0.0)
    f = jnp.maximum(ln(f @ params["wf2"] + params["bf2"],
                       params["gf2"], params["bef2"]), 0.0)
    o = jnp.maximum(ln(f @ params["wo1"] + params["bo1"],
                       params["go1"], params["beo1"]), 0.0)
    return o @ params["wo2"] + params["bo2"]


# ------------------------------- demo --------------------------------------------
if __name__ == "__main__":
    key = jax.random.PRNGKey(0)
    state_dim, action_dim, hidden_dim, batch = 6, 3, 32, 8

    pkey, skey, akey = jax.random.split(key, 3)
    params = init_params(pkey, state_dim=state_dim, action_dim=action_dim,
                         hidden_dim=hidden_dim)
    packed = pack_params(params)

    state = jax.random.normal(skey, (batch, state_dim), dtype=jnp.float32)
    action = jax.random.normal(akey, (batch, action_dim), dtype=jnp.float32)

    out = simple_encoder_forward(packed, state, action)
    jax.block_until_ready(out)
    assert out.shape == (batch, hidden_dim)
    assert bool(jnp.all(jnp.isfinite(out)))
    ref = _ref_forward(params, state, action)
    # bf16 matmuls vs f32 reference -> relaxed tolerance
    assert bool(jnp.allclose(out, ref, atol=5e-2, rtol=5e-2)), \
        "mismatch vs JAX reference (small batch)"

    # Second shape: batch that is not a multiple of the tile, exercising the
    # cdiv grid + masked partial last tile and the 2-step (megacore) grid.
    batch2 = 50
    skey2, akey2 = jax.random.split(jax.random.PRNGKey(1))
    state2 = jax.random.normal(skey2, (batch2, state_dim), dtype=jnp.float32)
    action2 = jax.random.normal(akey2, (batch2, action_dim), dtype=jnp.float32)
    out2 = simple_encoder_forward(packed, state2, action2)
    jax.block_until_ready(out2)
    ref2 = _ref_forward(params, state2, action2)
    assert out2.shape == (batch2, hidden_dim)
    assert bool(jnp.all(jnp.isfinite(out2)))
    assert bool(jnp.allclose(out2, ref2, atol=5e-2, rtol=5e-2)), \
        "mismatch vs JAX reference (odd batch)"

    print("KERNEL_OK")
</pallas_src>

<mosaic_0001>
module attributes {stable_mosaic.version = 11 : i64} {
  func.func @_encoder_kernel(%arg0: i32, %arg1: memref<8x6xf32, #tpu.memory_space<vmem>>, %arg2: memref<8x3xf32, #tpu.memory_space<vmem>>, %arg3: memref<6x32xbf16, #tpu.memory_space<vmem>>, %arg4: memref<3x32xbf16, #tpu.memory_space<vmem>>, %arg5: memref<5x32x32xbf16, #tpu.memory_space<vmem>>, %arg6: memref<16x32xf32, #tpu.memory_space<vmem>>, %arg7: memref<8x32xf32, #tpu.memory_space<vmem>>) attributes {dimension_semantics = [#tpu.dimension_semantics<parallel>], iteration_bounds = array<i64: 1>, scalar_prefetch = 0 : i64, scratch_operands = 0 : i64, tpu.core_type = #tpu.core_type<tc>, window_params = [{transform_indices = @transform_0, window_bounds = array<i64: 8, 6>}, {transform_indices = @transform_1, window_bounds = array<i64: 8, 3>}, {pipeline_mode = #tpu.pipeline_mode<synchronous>, transform_indices = @transform_2, window_bounds = array<i64: 6, 32>}, {pipeline_mode = #tpu.pipeline_mode<synchronous>, transform_indices = @transform_3, window_bounds = array<i64: 3, 32>}, {pipeline_mode = #tpu.pipeline_mode<synchronous>, transform_indices = @transform_4, window_bounds = array<i64: 5, 32, 32>}, {pipeline_mode = #tpu.pipeline_mode<synchronous>, transform_indices = @transform_5, window_bounds = array<i64: 16, 32>}, {transform_indices = @transform_6, window_bounds = array<i64: 8, 32>}]} {
    %c0 = arith.constant 0 : index
    %c0_0 = arith.constant 0 : index
    %0 = vector.load %arg1[%c0, %c0_0] : memref<8x6xf32, #tpu.memory_space<vmem>>, vector<8x6xf32>
    %c0_1 = arith.constant 0 : index
    %c0_2 = arith.constant 0 : index
    %1 = vector.load %arg3[%c0_1, %c0_2] : memref<6x32xbf16, #tpu.memory_space<vmem>>, vector<6x32xbf16>
    %2 = arith.truncf %0 : vector<8x6xf32> to vector<8x6xbf16>
    %cst = arith.constant dense<0.000000e+00> : vector<8x32xf32>
    %3 = tpu.matmul %2, %1, %cst {dimension_numbers = #tpu.dot_dimension_numbers<[1], [0], [0], [1], [0, 0, 1, 1], [], []>} : vector<8x6xbf16>, vector<6x32xbf16>, vector<8x32xf32> -> vector<8x32xf32>
    %c0_3 = arith.constant 0 : index
    %c0_4 = arith.constant 0 : index
    %4 = vector.load %arg6[%c0_3, %c0_4] : memref<16x32xf32, #tpu.memory_space<vmem>>, vector<1x32xf32>
    %5 = vector.broadcast %4 : vector<1x32xf32> to vector<8x32xf32>
    %6 = arith.addf %3, %5 : vector<8x32xf32>
    %cst_5 = arith.constant dense<0.000000e+00> : vector<8xf32>
    %7 = vector.multi_reduction <add>, %6, %cst_5 [1] : vector<8x32xf32> to vector<8xf32>
    %8 = vector.shape_cast %7 : vector<8xf32> to vector<8x1xf32>
    %cst_6 = arith.constant 3.200000e+01 : f32
    %9 = vector.broadcast %cst_6 : f32 to vector<8x1xf32>
    %10 = arith.divf %8, %9 : vector<8x1xf32>
    %11 = arith.mulf %6, %6 : vector<8x32xf32>
    %cst_7 = arith.constant dense<0.000000e+00> : vector<8xf32>
    %12 = vector.multi_reduction <add>, %11, %cst_7 [1] : vector<8x32xf32> to vector<8xf32>
    %13 = vector.shape_cast %12 : vector<8xf32> to vector<8x1xf32>
    %cst_8 = arith.constant 3.200000e+01 : f32
    %14 = vector.broadcast %cst_8 : f32 to vector<8x1xf32>
    %15 = arith.divf %13, %14 : vector<8x1xf32>
    %16 = arith.mulf %10, %10 : vector<8x1xf32>
    %17 = arith.subf %15, %16 : vector<8x1xf32>
    %18 = vector.broadcast %10 : vector<8x1xf32> to vector<8x32xf32>
    %19 = arith.subf %6, %18 : vector<8x32xf32>
    %cst_9 = arith.constant 9.99999974E-6 : f32
    %20 = vector.broadcast %cst_9 : f32 to vector<8x1xf32>
    %21 = arith.addf %17, %20 : vector<8x1xf32>
    %22 = math.rsqrt %21 : vector<8x1xf32>
    %23 = vector.broadcast %22 : vector<8x1xf32> to vector<8x32xf32>
    %24 = arith.mulf %19, %23 : vector<8x32xf32>
    %c1 = arith.constant 1 : index
    %c0_10 = arith.constant 0 : index
    %25 = vector.load %arg6[%c1, %c0_10] : memref<16x32xf32, #tpu.memory_space<vmem>>, vector<1x32xf32>
    %26 = vector.broadcast %25 : vector<1x32xf32> to vector<8x32xf32>
    %27 = arith.mulf %24, %26 : vector<8x32xf32>
    %c2 = arith.constant 2 : index
    %c0_11 = arith.constant 0 : index
    %28 = vector.load %arg6[%c2, %c0_11] : memref<16x32xf32, #tpu.memory_space<vmem>>, vector<1x32xf32>
    %29 = vector.broadcast %28 : vector<1x32xf32> to vector<8x32xf32>
    %30 = arith.addf %27, %29 : vector<8x32xf32>
    %cst_12 = arith.constant 0.000000e+00 : f32
    %31 = vector.broadcast %cst_12 : f32 to vector<8x32xf32>
    %32 = arith.maximumf %30, %31 : vector<8x32xf32>
    %c0_13 = arith.constant 0 : index
    %c0_14 = arith.constant 0 : index
    %33 = vector.load %arg2[%c0_13, %c0_14] : memref<8x3xf32, #tpu.memory_space<vmem>>, vector<8x3xf32>
    %c0_15 = arith.constant 0 : index
    %c0_16 = arith.constant 0 : index
    %34 = vector.load %arg4[%c0_15, %c0_16] : memref<3x32xbf16, #tpu.memory_space<vmem>>, vector<3x32xbf16>
    %35 = arith.truncf %33 : vector<8x3xf32> to vector<8x3xbf16>
    %cst_17 = arith.constant dense<0.000000e+00> : vector<8x32xf32>
    %36 = tpu.matmul %35, %34, %cst_17 {dimension_numbers = #tpu.dot_dimension_numbers<[1], [0], [0], [1], [0, 0, 1, 1], [], []>} : vector<8x3xbf16>, vector<3x32xbf16>, vector<8x32xf32> -> vector<8x32xf32>
    %c3 = arith.constant 3 : index
    %c0_18 = arith.constant 0 : index
    %37 = vector.load %arg6[%c3, %c0_18] : memref<16x32xf32, #tpu.memory_space<vmem>>, vector<1x32xf32>
    %38 = vector.broadcast %37 : vector<1x32xf32> to vector<8x32xf32>
    %39 = arith.addf %36, %38 : vector<8x32xf32>
    %cst_19 = arith.constant dense<0.000000e+00> : vector<8xf32>
    %40 = vector.multi_reduction <add>, %39, %cst_19 [1] : vector<8x32xf32> to vector<8xf32>
    %41 = vector.shape_cast %40 : vector<8xf32> to vector<8x1xf32>
    %cst_20 = arith.constant 3.200000e+01 : f32
    %42 = vector.broadcast %cst_20 : f32 to vector<8x1xf32>
    %43 = arith.divf %41, %42 : vector<8x1xf32>
    %44 = arith.mulf %39, %39 : vector<8x32xf32>
    %cst_21 = arith.constant dense<0.000000e+00> : vector<8xf32>
    %45 = vector.multi_reduction <add>, %44, %cst_21 [1] : vector<8x32xf32> to vector<8xf32>
    %46 = vector.shape_cast %45 : vector<8xf32> to vector<8x1xf32>
    %cst_22 = arith.constant 3.200000e+01 : f32
    %47 = vector.broadcast %cst_22 : f32 to vector<8x1xf32>
    %48 = arith.divf %46, %47 : vector<8x1xf32>
    %49 = arith.mulf %43, %43 : vector<8x1xf32>
    %50 = arith.subf %48, %49 : vector<8x1xf32>
    %51 = vector.broadcast %43 : vector<8x1xf32> to vector<8x32xf32>
    %52 = arith.subf %39, %51 : vector<8x32xf32>
    %cst_23 = arith.constant 9.99999974E-6 : f32
    %53 = vector.broadcast %cst_23 : f32 to vector<8x1xf32>
    %54 = arith.addf %50, %53 : vector<8x1xf32>
    %55 = math.rsqrt %54 : vector<8x1xf32>
    %56 = vector.broadcast %55 : vector<8x1xf32> to vector<8x32xf32>
    %57 = arith.mulf %52, %56 : vector<8x32xf32>
    %c4 = arith.constant 4 : index
    %c0_24 = arith.constant 0 : index
    %58 = vector.load %arg6[%c4, %c0_24] : memref<16x32xf32, #tpu.memory_space<vmem>>, vector<1x32xf32>
    %59 = vector.broadcast %58 : vector<1x32xf32> to vector<8x32xf32>
    %60 = arith.mulf %57, %59 : vector<8x32xf32>
    %c5 = arith.constant 5 : index
    %c0_25 = arith.constant 0 : index
    %61 = vector.load %arg6[%c5, %c0_25] : memref<16x32xf32, #tpu.memory_space<vmem>>, vector<1x32xf32>
    %62 = vector.broadcast %61 : vector<1x32xf32> to vector<8x32xf32>
    %63 = arith.addf %60, %62 : vector<8x32xf32>
    %cst_26 = arith.constant 0.000000e+00 : f32
    %64 = vector.broadcast %cst_26 : f32 to vector<8x32xf32>
    %65 = arith.maximumf %63, %64 : vector<8x32xf32>
    %c0_27 = arith.constant 0 : index
    %c0_28 = arith.constant 0 : index
    %c0_29 = arith.constant 0 : index
    %66 = vector.load %arg5[%c0_27, %c0_28, %c0_29] : memref<5x32x32xbf16, #tpu.memory_space<vmem>>, vector<1x32x32xbf16>
    %67 = vector.shape_cast %66 : vector<1x32x32xbf16> to vector<32x32xbf16>
    %68 = arith.truncf %32 : vector<8x32xf32> to vector<8x32xbf16>
    %cst_30 = arith.constant dense<0.000000e+00> : vector<8x32xf32>
    %69 = tpu.matmul %68, %67, %cst_30 {dimension_numbers = #tpu.dot_dimension_numbers<[1], [0], [0], [1], [0, 0, 1, 1], [], []>} : vector<8x32xbf16>, vector<32x32xbf16>, vector<8x32xf32> -> vector<8x32xf32>
    %c1_31 = arith.constant 1 : index
    %c0_32 = arith.constant 0 : index
    %c0_33 = arith.constant 0 : index
    %70 = vector.load %arg5[%c1_31, %c0_32, %c0_33] : memref<5x32x32xbf16, #tpu.memory_space<vmem>>, vector<1x32x32xbf16>
    %71 = vector.shape_cast %70 : vector<1x32x32xbf16> to vector<32x32xbf16>
    %72 = arith.truncf %65 : vector<8x32xf32> to vector<8x32xbf16>
    %cst_34 = arith.constant dense<0.000000e+00> : vector<8x32xf32>
    %73 = tpu.matmul %72, %71, %cst_34 {dimension_numbers = #tpu.dot_dimension_numbers<[1], [0], [0], [1], [0, 0, 1, 1], [], []>} : vector<8x32xbf16>, vector<32x32xbf16>, vector<8x32xf32> -> vector<8x32xf32>
    %74 = arith.addf %69, %73 : vector<8x32xf32>
    %c6 = arith.constant 6 : index
    %c0_35 = arith.constant 0 : index
    %75 = vector.load %arg6[%c6, %c0_35] : memref<16x32xf32, #tpu.memory_space<vmem>>, vector<1x32xf32>
    %76 = vector.broadcast %75 : vector<1x32xf32> to vector<8x32xf32>
    %77 = arith.addf %74, %76 : vector<8x32xf32>
    %cst_36 = arith.constant dense<0.000000e+00> : vector<8xf32>
    %78 = vector.multi_reduction <add>, %77, %cst_36 [1] : vector<8x32xf32> to vector<8xf32>
    %79 = vector.shape_cast %78 : vector<8xf32> to vector<8x1xf32>
    %cst_37 = arith.constant 3.200000e+01 : f32
    %80 = vector.broadcast %cst_37 : f32 to vector<8x1xf32>
    %81 = arith.divf %79, %80 : vector<8x1xf32>
    %82 = arith.mulf %77, %77 : vector<8x32xf32>
    %cst_38 = arith.constant dense<0.000000e+00> : vector<8xf32>
    %83 = vector.multi_reduction <add>, %82, %cst_38 [1] : vector<8x32xf32> to vector<8xf32>
    %84 = vector.shape_cast %83 : vector<8xf32> to vector<8x1xf32>
    %cst_39 = arith.constant 3.200000e+01 : f32
    %85 = vector.broadcast %cst_39 : f32 to vector<8x1xf32>
    %86 = arith.divf %84, %85 : vector<8x1xf32>
    %87 = arith.mulf %81, %81 : vector<8x1xf32>
    %88 = arith.subf %86, %87 : vector<8x1xf32>
    %89 = vector.broadcast %81 : vector<8x1xf32> to vector<8x32xf32>
    %90 = arith.subf %77, %89 : vector<8x32xf32>
    %cst_40 = arith.constant 9.99999974E-6 : f32
    %91 = vector.broadcast %cst_40 : f32 to vector<8x1xf32>
    %92 = arith.addf %88, %91 : vector<8x1xf32>
    %93 = math.rsqrt %92 : vector<8x1xf32>
    %94 = vector.broadcast %93 : vector<8x1xf32> to vector<8x32xf32>
    %95 = arith.mulf %90, %94 : vector<8x32xf32>
    %c7 = arith.constant 7 : index
    %c0_41 = arith.constant 0 : index
    %96 = vector.load %arg6[%c7, %c0_41] : memref<16x32xf32, #tpu.memory_space<vmem>>, vector<1x32xf32>
    %97 = vector.broadcast %96 : vector<1x32xf32> to vector<8x32xf32>
    %98 = arith.mulf %95, %97 : vector<8x32xf32>
    %c8 = arith.constant 8 : index
    %c0_42 = arith.constant 0 : index
    %99 = vector.load %arg6[%c8, %c0_42] : memref<16x32xf32, #tpu.memory_space<vmem>>, vector<1x32xf32>
    %100 = vector.broadcast %99 : vector<1x32xf32> to vector<8x32xf32>
    %101 = arith.addf %98, %100 : vector<8x32xf32>
    %cst_43 = arith.constant 0.000000e+00 : f32
    %102 = vector.broadcast %cst_43 : f32 to vector<8x32xf32>
    %103 = arith.maximumf %101, %102 : vector<8x32xf32>
    %c2_44 = arith.constant 2 : index
    %c0_45 = arith.constant 0 : index
    %c0_46 = arith.constant 0 : index
    %104 = vector.load %arg5[%c2_44, %c0_45, %c0_46] : memref<5x32x32xbf16, #tpu.memory_space<vmem>>, vector<1x32x32xbf16>
    %105 = vector.shape_cast %104 : vector<1x32x32xbf16> to vector<32x32xbf16>
    %106 = arith.truncf %103 : vector<8x32xf32> to vector<8x32xbf16>
    %cst_47 = arith.constant dense<0.000000e+00> : vector<8x32xf32>
    %107 = tpu.matmul %106, %105, %cst_47 {dimension_numbers = #tpu.dot_dimension_numbers<[1], [0], [0], [1], [0, 0, 1, 1], [], []>} : vector<8x32xbf16>, vector<32x32xbf16>, vector<8x32xf32> -> vector<8x32xf32>
    %c9 = arith.constant 9 : index
    %c0_48 = arith.constant 0 : index
    %108 = vector.load %arg6[%c9, %c0_48] : memref<16x32xf32, #tpu.memory_space<vmem>>, vector<1x32xf32>
    %109 = vector.broadcast %108 : vector<1x32xf32> to vector<8x32xf32>
    %110 = arith.addf %107, %109 : vector<8x32xf32>
    %cst_49 = arith.constant dense<0.000000e+00> : vector<8xf32>
    %111 = vector.multi_reduction <add>, %110, %cst_49 [1] : vector<8x32xf32> to vector<8xf32>
    %112 = vector.shape_cast %111 : vector<8xf32> to vector<8x1xf32>
    %cst_50 = arith.constant 3.200000e+01 : f32
    %113 = vector.broadcast %cst_50 : f32 to vector<8x1xf32>
    %114 = arith.divf %112, %113 : vector<8x1xf32>
    %115 = arith.mulf %110, %110 : vector<8x32xf32>
    %cst_51 = arith.constant dense<0.000000e+00> : vector<8xf32>
    %116 = vector.multi_reduction <add>, %115, %cst_51 [1] : vector<8x32xf32> to vector<8xf32>
    %117 = vector.shape_cast %116 : vector<8xf32> to vector<8x1xf32>
    %cst_52 = arith.constant 3.200000e+01 : f32
    %118 = vector.broadcast %cst_52 : f32 to vector<8x1xf32>
    %119 = arith.divf %117, %118 : vector<8x1xf32>
    %120 = arith.mulf %114, %114 : vector<8x1xf32>
    %121 = arith.subf %119, %120 : vector<8x1xf32>
    %122 = vector.broadcast %114 : vector<8x1xf32> to vector<8x32xf32>
    %123 = arith.subf %110, %122 : vector<8x32xf32>
    %cst_53 = arith.constant 9.99999974E-6 : f32
    %124 = vector.broadcast %cst_53 : f32 to vector<8x1xf32>
    %125 = arith.addf %121, %124 : vector<8x1xf32>
    %126 = math.rsqrt %125 : vector<8x1xf32>
    %127 = vector.broadcast %126 : vector<8x1xf32> to vector<8x32xf32>
    %128 = arith.mulf %123, %127 : vector<8x32xf32>
    %c10 = arith.constant 10 : index
    %c0_54 = arith.constant 0 : index
    %129 = vector.load %arg6[%c10, %c0_54] : memref<16x32xf32, #tpu.memory_space<vmem>>, vector<1x32xf32>
    %130 = vector.broadcast %129 : vector<1x32xf32> to vector<8x32xf32>
    %131 = arith.mulf %128, %130 : vector<8x32xf32>
    %c11 = arith.constant 11 : index
    %c0_55 = arith.constant 0 : index
    %132 = vector.load %arg6[%c11, %c0_55] : memref<16x32xf32, #tpu.memory_space<vmem>>, vector<1x32xf32>
    %133 = vector.broadcast %132 : vector<1x32xf32> to vector<8x32xf32>
    %134 = arith.addf %131, %133 : vector<8x32xf32>
    %cst_56 = arith.constant 0.000000e+00 : f32
    %135 = vector.broadcast %cst_56 : f32 to vector<8x32xf32>
    %136 = arith.maximumf %134, %135 : vector<8x32xf32>
    %c3_57 = arith.constant 3 : index
    %c0_58 = arith.constant 0 : index
    %c0_59 = arith.constant 0 : index
    %137 = vector.load %arg5[%c3_57, %c0_58, %c0_59] : memref<5x32x32xbf16, #tpu.memory_space<vmem>>, vector<1x32x32xbf16>
    %138 = vector.shape_cast %137 : vector<1x32x32xbf16> to vector<32x32xbf16>
    %139 = arith.truncf %136 : vector<8x32xf32> to vector<8x32xbf16>
    %cst_60 = arith.constant dense<0.000000e+00> : vector<8x32xf32>
    %140 = tpu.matmul %139, %138, %cst_60 {dimension_numbers = #tpu.dot_dimension_numbers<[1], [0], [0], [1], [0, 0, 1, 1], [], []>} : vector<8x32xbf16>, vector<32x32xbf16>, vector<8x32xf32> -> vector<8x32xf32>
    %c12 = arith.constant 12 : index
    %c0_61 = arith.constant 0 : index
    %141 = vector.load %arg6[%c12, %c0_61] : memref<16x32xf32, #tpu.memory_space<vmem>>, vector<1x32xf32>
    %142 = vector.broadcast %141 : vector<1x32xf32> to vector<8x32xf32>
    %143 = arith.addf %140, %142 : vector<8x32xf32>
    %cst_62 = arith.constant dense<0.000000e+00> : vector<8xf32>
    %144 = vector.multi_reduction <add>, %143, %cst_62 [1] : vector<8x32xf32> to vector<8xf32>
    %145 = vector.shape_cast %144 : vector<8xf32> to vector<8x1xf32>
    %cst_63 = arith.constant 3.200000e+01 : f32
    %146 = vector.broadcast %cst_63 : f32 to vector<8x1xf32>
    %147 = arith.divf %145, %146 : vector<8x1xf32>
    %148 = arith.mulf %143, %143 : vector<8x32xf32>
    %cst_64 = arith.constant dense<0.000000e+00> : vector<8xf32>
    %149 = vector.multi_reduction <add>, %148, %cst_64 [1] : vector<8x32xf32> to vector<8xf32>
    %150 = vector.shape_cast %149 : vector<8xf32> to vector<8x1xf32>
    %cst_65 = arith.constant 3.200000e+01 : f32
    %151 = vector.broadcast %cst_65 : f32 to vector<8x1xf32>
    %152 = arith.divf %150, %151 : vector<8x1xf32>
    %153 = arith.mulf %147, %147 : vector<8x1xf32>
    %154 = arith.subf %152, %153 : vector<8x1xf32>
    %155 = vector.broadcast %147 : vector<8x1xf32> to vector<8x32xf32>
    %156 = arith.subf %143, %155 : vector<8x32xf32>
    %cst_66 = arith.constant 9.99999974E-6 : f32
    %157 = vector.broadcast %cst_66 : f32 to vector<8x1xf32>
    %158 = arith.addf %154, %157 : vector<8x1xf32>
    %159 = math.rsqrt %158 : vector<8x1xf32>
    %160 = vector.broadcast %159 : vector<8x1xf32> to vector<8x32xf32>
    %161 = arith.mulf %156, %160 : vector<8x32xf32>
    %c13 = arith.constant 13 : index
    %c0_67 = arith.constant 0 : index
    %162 = vector.load %arg6[%c13, %c0_67] : memref<16x32xf32, #tpu.memory_space<vmem>>, vector<1x32xf32>
    %163 = vector.broadcast %162 : vector<1x32xf32> to vector<8x32xf32>
    %164 = arith.mulf %161, %163 : vector<8x32xf32>
    %c14 = arith.constant 14 : index
    %c0_68 = arith.constant 0 : index
    %165 = vector.load %arg6[%c14, %c0_68] : memref<16x32xf32, #tpu.memory_space<vmem>>, vector<1x32xf32>
    %166 = vector.broadcast %165 : vector<1x32xf32> to vector<8x32xf32>
    %167 = arith.addf %164, %166 : vector<8x32xf32>
    %cst_69 = arith.constant 0.000000e+00 : f32
    %168 = vector.broadcast %cst_69 : f32 to vector<8x32xf32>
    %169 = arith.maximumf %167, %168 : vector<8x32xf32>
    %c4_70 = arith.constant 4 : index
    %c0_71 = arith.constant 0 : index
    %c0_72 = arith.constant 0 : index
    %170 = vector.load %arg5[%c4_70, %c0_71, %c0_72] : memref<5x32x32xbf16, #tpu.memory_space<vmem>>, vector<1x32x32xbf16>
    %171 = vector.shape_cast %170 : vector<1x32x32xbf16> to vector<32x32xbf16>
    %172 = arith.truncf %169 : vector<8x32xf32> to vector<8x32xbf16>
    %cst_73 = arith.constant dense<0.000000e+00> : vector<8x32xf32>
    %173 = tpu.matmul %172, %171, %cst_73 {dimension_numbers = #tpu.dot_dimension_numbers<[1], [0], [0], [1], [0, 0, 1, 1], [], []>} : vector<8x32xbf16>, vector<32x32xbf16>, vector<8x32xf32> -> vector<8x32xf32>
    %c15 = arith.constant 15 : index
    %c0_74 = arith.constant 0 : index
    %174 = vector.load %arg6[%c15, %c0_74] : memref<16x32xf32, #tpu.memory_space<vmem>>, vector<1x32xf32>
    %175 = vector.broadcast %174 : vector<1x32xf32> to vector<8x32xf32>
    %176 = arith.addf %173, %175 : vector<8x32xf32>
    %c0_75 = arith.constant 0 : index
    %c0_76 = arith.constant 0 : index
    %177 = vector.load %arg7[%c0_75, %c0_76] : memref<8x32xf32, #tpu.memory_space<vmem>>, vector<8x32xf32>
    tpu.vector_store %arg7[%c0_75, %c0_76], %176 {strides = array<i32>} : memref<8x32xf32, #tpu.memory_space<vmem>>, vector<8x32xf32>,
    return
  }
  func.func @transform_0(%arg0: i32) -> (i32, i32) {
    %c0_i32 = arith.constant 0 : i32
    %c0_i32_0 = arith.constant 0 : i32
    return %arg0, %c0_i32 : i32, i32
  }
  func.func @transform_1(%arg0: i32) -> (i32, i32) {
    %c0_i32 = arith.constant 0 : i32
    %c0_i32_0 = arith.constant 0 : i32
    return %arg0, %c0_i32 : i32, i32
  }
  func.func @transform_2(%arg0: i32) -> (i32, i32) {
    %c0_i32 = arith.constant 0 : i32
    %c0_i32_0 = arith.constant 0 : i32
    %c0_i32_1 = arith.constant 0 : i32
    return %c0_i32, %c0_i32_0 : i32, i32
  }
  func.func @transform_3(%arg0: i32) -> (i32, i32) {
    %c0_i32 = arith.constant 0 : i32
    %c0_i32_0 = arith.constant 0 : i32
    %c0_i32_1 = arith.constant 0 : i32
    return %c0_i32, %c0_i32_0 : i32, i32
  }
  func.func @transform_4(%arg0: i32) -> (i32, i32, i32) {
    %c0_i32 = arith.constant 0 : i32
    %c0_i32_0 = arith.constant 0 : i32
    %c0_i32_1 = arith.constant 0 : i32
    %c0_i32_2 = arith.constant 0 : i32
    return %c0_i32, %c0_i32_0, %c0_i32_1 : i32, i32, i32
  }
  func.func @transform_5(%arg0: i32) -> (i32, i32) {
    %c0_i32 = arith.constant 0 : i32
    %c0_i32_0 = arith.constant 0 : i32
    %c0_i32_1 = arith.constant 0 : i32
    return %c0_i32, %c0_i32_0 : i32, i32
  }
  func.func @transform_6(%arg0: i32) -> (i32, i32) {
    %c0_i32 = arith.constant 0 : i32
    %c0_i32_0 = arith.constant 0 : i32
    return %arg0, %c0_i32 : i32, i32
  }
}

module attributes {stable_mosaic.version = 11 : i64} {
  func.func @_encoder_kernel(%arg0: i32, %arg1: memref<8x6xf32, #tpu.memory_space<vmem>>, %arg2: memref<8x3xf32, #tpu.memory_space<vmem>>, %arg3: memref<6x32xbf16, #tpu.memory_space<vmem>>, %arg4: memref<3x32xbf16, #tpu.memory_space<vmem>>, %arg5: memref<5x32x32xbf16, #tpu.memory_space<vmem>>, %arg6: memref<16x32xf32, #tpu.memory_space<vmem>>, %arg7: memref<8x32xf32, #tpu.memory_space<vmem>>) attributes {dimension_semantics = [#tpu.dimension_semantics<parallel>], iteration_bounds = array<i64: 1>, scalar_prefetch = 0 : i64, scratch_operands = 0 : i64, tpu.core_type = #tpu.core_type<tc>, window_params = [{transform_indices = @transform_0, window_bounds = array<i64: 8, 6>}, {transform_indices = @transform_1, window_bounds = array<i64: 8, 3>}, {pipeline_mode = #tpu.pipeline_mode<synchronous>, transform_indices = @transform_2, window_bounds = array<i64: 6, 32>}, {pipeline_mode = #tpu.pipeline_mode<synchronous>, transform_indices = @transform_3, window_bounds = array<i64: 3, 32>}, {pipeline_mode = #tpu.pipeline_mode<synchronous>, transform_indices = @transform_4, window_bounds = array<i64: 5, 32, 32>}, {pipeline_mode = #tpu.pipeline_mode<synchronous>, transform_indices = @transform_5, window_bounds = array<i64: 16, 32>}, {transform_indices = @transform_6, window_bounds = array<i64: 8, 32>}]} {
    %c0 = arith.constant 0 : index
    %c0_0 = arith.constant 0 : index
    %0 = vector.load %arg1[%c0, %c0_0] : memref<8x6xf32, #tpu.memory_space<vmem>>, vector<8x6xf32>
    %c0_1 = arith.constant 0 : index
    %c0_2 = arith.constant 0 : index
    %1 = vector.load %arg3[%c0_1, %c0_2] : memref<6x32xbf16, #tpu.memory_space<vmem>>, vector<6x32xbf16>
    %2 = arith.truncf %0 : vector<8x6xf32> to vector<8x6xbf16>
    %cst = arith.constant dense<0.000000e+00> : vector<8x32xf32>
    %3 = tpu.matmul %2, %1, %cst {dimension_numbers = #tpu.dot_dimension_numbers<[1], [0], [0], [1], [0, 0, 1, 1], [], []>} : vector<8x6xbf16>, vector<6x32xbf16>, vector<8x32xf32> -> vector<8x32xf32>
    %c0_3 = arith.constant 0 : index
    %c0_4 = arith.constant 0 : index
    %4 = vector.load %arg6[%c0_3, %c0_4] : memref<16x32xf32, #tpu.memory_space<vmem>>, vector<1x32xf32>
    %5 = vector.broadcast %4 : vector<1x32xf32> to vector<8x32xf32>
    %6 = arith.addf %3, %5 : vector<8x32xf32>
    %cst_5 = arith.constant dense<0.000000e+00> : vector<8xf32>
    %7 = vector.multi_reduction <add>, %6, %cst_5 [1] : vector<8x32xf32> to vector<8xf32>
    %8 = vector.shape_cast %7 : vector<8xf32> to vector<8x1xf32>
    %cst_6 = arith.constant 3.200000e+01 : f32
    %9 = vector.broadcast %cst_6 : f32 to vector<8x1xf32>
    %10 = arith.divf %8, %9 : vector<8x1xf32>
    %11 = arith.mulf %6, %6 : vector<8x32xf32>
    %cst_7 = arith.constant dense<0.000000e+00> : vector<8xf32>
    %12 = vector.multi_reduction <add>, %11, %cst_7 [1] : vector<8x32xf32> to vector<8xf32>
    %13 = vector.shape_cast %12 : vector<8xf32> to vector<8x1xf32>
    %cst_8 = arith.constant 3.200000e+01 : f32
    %14 = vector.broadcast %cst_8 : f32 to vector<8x1xf32>
    %15 = arith.divf %13, %14 : vector<8x1xf32>
    %16 = arith.mulf %10, %10 : vector<8x1xf32>
    %17 = arith.subf %15, %16 : vector<8x1xf32>
    %18 = vector.broadcast %10 : vector<8x1xf32> to vector<8x32xf32>
    %19 = arith.subf %6, %18 : vector<8x32xf32>
    %cst_9 = arith.constant 9.99999974E-6 : f32
    %20 = vector.broadcast %cst_9 : f32 to vector<8x1xf32>
    %21 = arith.addf %17, %20 : vector<8x1xf32>
    %22 = math.rsqrt %21 : vector<8x1xf32>
    %23 = vector.broadcast %22 : vector<8x1xf32> to vector<8x32xf32>
    %24 = arith.mulf %19, %23 : vector<8x32xf32>
    %c1 = arith.constant 1 : index
    %c0_10 = arith.constant 0 : index
    %25 = vector.load %arg6[%c1, %c0_10] : memref<16x32xf32, #tpu.memory_space<vmem>>, vector<1x32xf32>
    %26 = vector.broadcast %25 : vector<1x32xf32> to vector<8x32xf32>
    %27 = arith.mulf %24, %26 : vector<8x32xf32>
    %c2 = arith.constant 2 : index
    %c0_11 = arith.constant 0 : index
    %28 = vector.load %arg6[%c2, %c0_11] : memref<16x32xf32, #tpu.memory_space<vmem>>, vector<1x32xf32>
    %29 = vector.broadcast %28 : vector<1x32xf32> to vector<8x32xf32>
    %30 = arith.addf %27, %29 : vector<8x32xf32>
    %cst_12 = arith.constant 0.000000e+00 : f32
    %31 = vector.broadcast %cst_12 : f32 to vector<8x32xf32>
    %32 = arith.maximumf %30, %31 : vector<8x32xf32>
    %c0_13 = arith.constant 0 : index
    %c0_14 = arith.constant 0 : index
    %33 = vector.load %arg2[%c0_13, %c0_14] : memref<8x3xf32, #tpu.memory_space<vmem>>, vector<8x3xf32>
    %c0_15 = arith.constant 0 : index
    %c0_16 = arith.constant 0 : index
    %34 = vector.load %arg4[%c0_15, %c0_16] : memref<3x32xbf16, #tpu.memory_space<vmem>>, vector<3x32xbf16>
    %35 = arith.truncf %33 : vector<8x3xf32> to vector<8x3xbf16>
    %cst_17 = arith.constant dense<0.000000e+00> : vector<8x32xf32>
    %36 = tpu.matmul %35, %34, %cst_17 {dimension_numbers = #tpu.dot_dimension_numbers<[1], [0], [0], [1], [0, 0, 1, 1], [], []>} : vector<8x3xbf16>, vector<3x32xbf16>, vector<8x32xf32> -> vector<8x32xf32>
    %c3 = arith.constant 3 : index
    %c0_18 = arith.constant 0 : index
    %37 = vector.load %arg6[%c3, %c0_18] : memref<16x32xf32, #tpu.memory_space<vmem>>, vector<1x32xf32>
    %38 = vector.broadcast %37 : vector<1x32xf32> to vector<8x32xf32>
    %39 = arith.addf %36, %38 : vector<8x32xf32>
    %cst_19 = arith.constant dense<0.000000e+00> : vector<8xf32>
    %40 = vector.multi_reduction <add>, %39, %cst_19 [1] : vector<8x32xf32> to vector<8xf32>
    %41 = vector.shape_cast %40 : vector<8xf32> to vector<8x1xf32>
    %cst_20 = arith.constant 3.200000e+01 : f32
    %42 = vector.broadcast %cst_20 : f32 to vector<8x1xf32>
    %43 = arith.divf %41, %42 : vector<8x1xf32>
    %44 = arith.mulf %39, %39 : vector<8x32xf32>
    %cst_21 = arith.constant dense<0.000000e+00> : vector<8xf32>
    %45 = vector.multi_reduction <add>, %44, %cst_21 [1] : vector<8x32xf32> to vector<8xf32>
    %46 = vector.shape_cast %45 : vector<8xf32> to vector<8x1xf32>
    %cst_22 = arith.constant 3.200000e+01 : f32
    %47 = vector.broadcast %cst_22 : f32 to vector<8x1xf32>
    %48 = arith.divf %46, %47 : vector<8x1xf32>
    %49 = arith.mulf %43, %43 : vector<8x1xf32>
    %50 = arith.subf %48, %49 : vector<8x1xf32>
    %51 = vector.broadcast %43 : vector<8x1xf32> to vector<8x32xf32>
    %52 = arith.subf %39, %51 : vector<8x32xf32>
    %cst_23 = arith.constant 9.99999974E-6 : f32
    %53 = vector.broadcast %cst_23 : f32 to vector<8x1xf32>
    %54 = arith.addf %50, %53 : vector<8x1xf32>
    %55 = math.rsqrt %54 : vector<8x1xf32>
    %56 = vector.broadcast %55 : vector<8x1xf32> to vector<8x32xf32>
    %57 = arith.mulf %52, %56 : vector<8x32xf32>
    %c4 = arith.constant 4 : index
    %c0_24 = arith.constant 0 : index
    %58 = vector.load %arg6[%c4, %c0_24] : memref<16x32xf32, #tpu.memory_space<vmem>>, vector<1x32xf32>
    %59 = vector.broadcast %58 : vector<1x32xf32> to vector<8x32xf32>
    %60 = arith.mulf %57, %59 : vector<8x32xf32>
    %c5 = arith.constant 5 : index
    %c0_25 = arith.constant 0 : index
    %61 = vector.load %arg6[%c5, %c0_25] : memref<16x32xf32, #tpu.memory_space<vmem>>, vector<1x32xf32>
    %62 = vector.broadcast %61 : vector<1x32xf32> to vector<8x32xf32>
    %63 = arith.addf %60, %62 : vector<8x32xf32>
    %cst_26 = arith.constant 0.000000e+00 : f32
    %64 = vector.broadcast %cst_26 : f32 to vector<8x32xf32>
    %65 = arith.maximumf %63, %64 : vector<8x32xf32>
    %c0_27 = arith.constant 0 : index
    %c0_28 = arith.constant 0 : index
    %c0_29 = arith.constant 0 : index
    %66 = vector.load %arg5[%c0_27, %c0_28, %c0_29] : memref<5x32x32xbf16, #tpu.memory_space<vmem>>, vector<1x32x32xbf16>
    %67 = vector.shape_cast %66 : vector<1x32x32xbf16> to vector<32x32xbf16>
    %68 = arith.truncf %32 : vector<8x32xf32> to vector<8x32xbf16>
    %cst_30 = arith.constant dense<0.000000e+00> : vector<8x32xf32>
    %69 = tpu.matmul %68, %67, %cst_30 {dimension_numbers = #tpu.dot_dimension_numbers<[1], [0], [0], [1], [0, 0, 1, 1], [], []>} : vector<8x32xbf16>, vector<32x32xbf16>, vector<8x32xf32> -> vector<8x32xf32>
    %c1_31 = arith.constant 1 : index
    %c0_32 = arith.constant 0 : index
    %c0_33 = arith.constant 0 : index
    %70 = vector.load %arg5[%c1_31, %c0_32, %c0_33] : memref<5x32x32xbf16, #tpu.memory_space<vmem>>, vector<1x32x32xbf16>
    %71 = vector.shape_cast %70 : vector<1x32x32xbf16> to vector<32x32xbf16>
    %72 = arith.truncf %65 : vector<8x32xf32> to vector<8x32xbf16>
    %cst_34 = arith.constant dense<0.000000e+00> : vector<8x32xf32>
    %73 = tpu.matmul %72, %71, %cst_34 {dimension_numbers = #tpu.dot_dimension_numbers<[1], [0], [0], [1], [0, 0, 1, 1], [], []>} : vector<8x32xbf16>, vector<32x32xbf16>, vector<8x32xf32> -> vector<8x32xf32>
    %74 = arith.addf %69, %73 : vector<8x32xf32>
    %c6 = arith.constant 6 : index
    %c0_35 = arith.constant 0 : index
    %75 = vector.load %arg6[%c6, %c0_35] : memref<16x32xf32, #tpu.memory_space<vmem>>, vector<1x32xf32>
    %76 = vector.broadcast %75 : vector<1x32xf32> to vector<8x32xf32>
    %77 = arith.addf %74, %76 : vector<8x32xf32>
    %cst_36 = arith.constant dense<0.000000e+00> : vector<8xf32>
    %78 = vector.multi_reduction <add>, %77, %cst_36 [1] : vector<8x32xf32> to vector<8xf32>
    %79 = vector.shape_cast %78 : vector<8xf32> to vector<8x1xf32>
    %cst_37 = arith.constant 3.200000e+01 : f32
    %80 = vector.broadcast %cst_37 : f32 to vector<8x1xf32>
    %81 = arith.divf %79, %80 : vector<8x1xf32>
    %82 = arith.mulf %77, %77 : vector<8x32xf32>
    %cst_38 = arith.constant dense<0.000000e+00> : vector<8xf32>
    %83 = vector.multi_reduction <add>, %82, %cst_38 [1] : vector<8x32xf32> to vector<8xf32>
    %84 = vector.shape_cast %83 : vector<8xf32> to vector<8x1xf32>
    %cst_39 = arith.constant 3.200000e+01 : f32
    %85 = vector.broadcast %cst_39 : f32 to vector<8x1xf32>
    %86 = arith.divf %84, %85 : vector<8x1xf32>
    %87 = arith.mulf %81, %81 : vector<8x1xf32>
    %88 = arith.subf %86, %87 : vector<8x1xf32>
    %89 = vector.broadcast %81 : vector<8x1xf32> to vector<8x32xf32>
    %90 = arith.subf %77, %89 : vector<8x32xf32>
    %cst_40 = arith.constant 9.99999974E-6 : f32
    %91 = vector.broadcast %cst_40 : f32 to vector<8x1xf32>
    %92 = arith.addf %88, %91 : vector<8x1xf32>
    %93 = math.rsqrt %92 : vector<8x1xf32>
    %94 = vector.broadcast %93 : vector<8x1xf32> to vector<8x32xf32>
    %95 = arith.mulf %90, %94 : vector<8x32xf32>
    %c7 = arith.constant 7 : index
    %c0_41 = arith.constant 0 : index
    %96 = vector.load %arg6[%c7, %c0_41] : memref<16x32xf32, #tpu.memory_space<vmem>>, vector<1x32xf32>
    %97 = vector.broadcast %96 : vector<1x32xf32> to vector<8x32xf32>
    %98 = arith.mulf %95, %97 : vector<8x32xf32>
    %c8 = arith.constant 8 : index
    %c0_42 = arith.constant 0 : index
    %99 = vector.load %arg6[%c8, %c0_42] : memref<16x32xf32, #tpu.memory_space<vmem>>, vector<1x32xf32>
    %100 = vector.broadcast %99 : vector<1x32xf32> to vector<8x32xf32>
    %101 = arith.addf %98, %100 : vector<8x32xf32>
    %cst_43 = arith.constant 0.000000e+00 : f32
    %102 = vector.broadcast %cst_43 : f32 to vector<8x32xf32>
    %103 = arith.maximumf %101, %102 : vector<8x32xf32>
    %c2_44 = arith.constant 2 : index
    %c0_45 = arith.constant 0 : index
    %c0_46 = arith.constant 0 : index
    %104 = vector.load %arg5[%c2_44, %c0_45, %c0_46] : memref<5x32x32xbf16, #tpu.memory_space<vmem>>, vector<1x32x32xbf16>
    %105 = vector.shape_cast %104 : vector<1x32x32xbf16> to vector<32x32xbf16>
    %106 = arith.truncf %103 : vector<8x32xf32> to vector<8x32xbf16>
    %cst_47 = arith.constant dense<0.000000e+00> : vector<8x32xf32>
    %107 = tpu.matmul %106, %105, %cst_47 {dimension_numbers = #tpu.dot_dimension_numbers<[1], [0], [0], [1], [0, 0, 1, 1], [], []>} : vector<8x32xbf16>, vector<32x32xbf16>, vector<8x32xf32> -> vector<8x32xf32>
    %c9 = arith.constant 9 : index
    %c0_48 = arith.constant 0 : index
    %108 = vector.load %arg6[%c9, %c0_48] : memref<16x32xf32, #tpu.memory_space<vmem>>, vector<1x32xf32>
    %109 = vector.broadcast %108 : vector<1x32xf32> to vector<8x32xf32>
    %110 = arith.addf %107, %109 : vector<8x32xf32>
    %cst_49 = arith.constant dense<0.000000e+00> : vector<8xf32>
    %111 = vector.multi_reduction <add>, %110, %cst_49 [1] : vector<8x32xf32> to vector<8xf32>
    %112 = vector.shape_cast %111 : vector<8xf32> to vector<8x1xf32>
    %cst_50 = arith.constant 3.200000e+01 : f32
    %113 = vector.broadcast %cst_50 : f32 to vector<8x1xf32>
    %114 = arith.divf %112, %113 : vector<8x1xf32>
    %115 = arith.mulf %110, %110 : vector<8x32xf32>
    %cst_51 = arith.constant dense<0.000000e+00> : vector<8xf32>
    %116 = vector.multi_reduction <add>, %115, %cst_51 [1] : vector<8x32xf32> to vector<8xf32>
    %117 = vector.shape_cast %116 : vector<8xf32> to vector<8x1xf32>
    %cst_52 = arith.constant 3.200000e+01 : f32
    %118 = vector.broadcast %cst_52 : f32 to vector<8x1xf32>
    %119 = arith.divf %117, %118 : vector<8x1xf32>
    %120 = arith.mulf %114, %114 : vector<8x1xf32>
    %121 = arith.subf %119, %120 : vector<8x1xf32>
    %122 = vector.broadcast %114 : vector<8x1xf32> to vector<8x32xf32>
    %123 = arith.subf %110, %122 : vector<8x32xf32>
    %cst_53 = arith.constant 9.99999974E-6 : f32
    %124 = vector.broadcast %cst_53 : f32 to vector<8x1xf32>
    %125 = arith.addf %121, %124 : vector<8x1xf32>
    %126 = math.rsqrt %125 : vector<8x1xf32>
    %127 = vector.broadcast %126 : vector<8x1xf32> to vector<8x32xf32>
    %128 = arith.mulf %123, %127 : vector<8x32xf32>
    %c10 = arith.constant 10 : index
    %c0_54 = arith.constant 0 : index
    %129 = vector.load %arg6[%c10, %c0_54] : memref<16x32xf32, #tpu.memory_space<vmem>>, vector<1x32xf32>
    %130 = vector.broadcast %129 : vector<1x32xf32> to vector<8x32xf32>
    %131 = arith.mulf %128, %130 : vector<8x32xf32>
    %c11 = arith.constant 11 : index
    %c0_55 = arith.constant 0 : index
    %132 = vector.load %arg6[%c11, %c0_55] : memref<16x32xf32, #tpu.memory_space<vmem>>, vector<1x32xf32>
    %133 = vector.broadcast %132 : vector<1x32xf32> to vector<8x32xf32>
    %134 = arith.addf %131, %133 : vector<8x32xf32>
    %cst_56 = arith.constant 0.000000e+00 : f32
    %135 = vector.broadcast %cst_56 : f32 to vector<8x32xf32>
    %136 = arith.maximumf %134, %135 : vector<8x32xf32>
    %c3_57 = arith.constant 3 : index
    %c0_58 = arith.constant 0 : index
    %c0_59 = arith.constant 0 : index
    %137 = vector.load %arg5[%c3_57, %c0_58, %c0_59] : memref<5x32x32xbf16, #tpu.memory_space<vmem>>, vector<1x32x32xbf16>
    %138 = vector.shape_cast %137 : vector<1x32x32xbf16> to vector<32x32xbf16>
    %139 = arith.truncf %136 : vector<8x32xf32> to vector<8x32xbf16>
    %cst_60 = arith.constant dense<0.000000e+00> : vector<8x32xf32>
    %140 = tpu.matmul %139, %138, %cst_60 {dimension_numbers = #tpu.dot_dimension_numbers<[1], [0], [0], [1], [0, 0, 1, 1], [], []>} : vector<8x32xbf16>, vector<32x32xbf16>, vector<8x32xf32> -> vector<8x32xf32>
    %c12 = arith.constant 12 : index
    %c0_61 = arith.constant 0 : index
    %141 = vector.load %arg6[%c12, %c0_61] : memref<16x32xf32, #tpu.memory_space<vmem>>, vector<1x32xf32>
    %142 = vector.broadcast %141 : vector<1x32xf32> to vector<8x32xf32>
    %143 = arith.addf %140, %142 : vector<8x32xf32>
    %cst_62 = arith.constant dense<0.000000e+00> : vector<8xf32>
    %144 = vector.multi_reduction <add>, %143, %cst_62 [1] : vector<8x32xf32> to vector<8xf32>
    %145 = vector.shape_cast %144 : vector<8xf32> to vector<8x1xf32>
    %cst_63 = arith.constant 3.200000e+01 : f32
    %146 = vector.broadcast %cst_63 : f32 to vector<8x1xf32>
    %147 = arith.divf %145, %146 : vector<8x1xf32>
    %148 = arith.mulf %143, %143 : vector<8x32xf32>
    %cst_64 = arith.constant dense<0.000000e+00> : vector<8xf32>
    %149 = vector.multi_reduction <add>, %148, %cst_64 [1] : vector<8x32xf32> to vector<8xf32>
    %150 = vector.shape_cast %149 : vector<8xf32> to vector<8x1xf32>
    %cst_65 = arith.constant 3.200000e+01 : f32
    %151 = vector.broadcast %cst_65 : f32 to vector<8x1xf32>
    %152 = arith.divf %150, %151 : vector<8x1xf32>
    %153 = arith.mulf %147, %147 : vector<8x1xf32>
    %154 = arith.subf %152, %153 : vector<8x1xf32>
    %155 = vector.broadcast %147 : vector<8x1xf32> to vector<8x32xf32>
    %156 = arith.subf %143, %155 : vector<8x32xf32>
    %cst_66 = arith.constant 9.99999974E-6 : f32
    %157 = vector.broadcast %cst_66 : f32 to vector<8x1xf32>
    %158 = arith.addf %154, %157 : vector<8x1xf32>
    %159 = math.rsqrt %158 : vector<8x1xf32>
    %160 = vector.broadcast %159 : vector<8x1xf32> to vector<8x32xf32>
    %161 = arith.mulf %156, %160 : vector<8x32xf32>
    %c13 = arith.constant 13 : index
    %c0_67 = arith.constant 0 : index
    %162 = vector.load %arg6[%c13, %c0_67] : memref<16x32xf32, #tpu.memory_space<vmem>>, vector<1x32xf32>
    %163 = vector.broadcast %162 : vector<1x32xf32> to vector<8x32xf32>
    %164 = arith.mulf %161, %163 : vector<8x32xf32>
    %c14 = arith.constant 14 : index
    %c0_68 = arith.constant 0 : index
    %165 = vector.load %arg6[%c14, %c0_68] : memref<16x32xf32, #tpu.memory_space<vmem>>, vector<1x32xf32>
    %166 = vector.broadcast %165 : vector<1x32xf32> to vector<8x32xf32>
    %167 = arith.addf %164, %166 : vector<8x32xf32>
    %cst_69 = arith.constant 0.000000e+00 : f32
    %168 = vector.broadcast %cst_69 : f32 to vector<8x32xf32>
    %169 = arith.maximumf %167, %168 : vector<8x32xf32>
    %c4_70 = arith.constant 4 : index
    %c0_71 = arith.constant 0 : index
    %c0_72 = arith.constant 0 : index
    %170 = vector.load %arg5[%c4_70, %c0_71, %c0_72] : memref<5x32x32xbf16, #tpu.memory_space<vmem>>, vector<1x32x32xbf16>
    %171 = vector.shape_cast %170 : vector<1x32x32xbf16> to vector<32x32xbf16>
    %172 = arith.truncf %169 : vector<8x32xf32> to vector<8x32xbf16>
    %cst_73 = arith.constant dense<0.000000e+00> : vector<8x32xf32>
    %173 = tpu.matmul %172, %171, %cst_73 {dimension_numbers = #tpu.dot_dimension_numbers<[1], [0], [0], [1], [0, 0, 1, 1], [], []>} : vector<8x32xbf16>, vector<32x32xbf16>, vector<8x32xf32> -> vector<8x32xf32>
    %c15 = arith.constant 15 : index
    %c0_74 = arith.constant 0 : index
    %174 = vector.load %arg6[%c15, %c0_74] : memref<16x32xf32, #tpu.memory_space<vmem>>, vector<1x32xf32>
    %175 = vector.broadcast %174 : vector<1x32xf32> to vector<8x32xf32>
    %176 = arith.addf %173, %175 : vector<8x32xf32>
    %c0_75 = arith.constant 0 : index
    %c0_76 = arith.constant 0 : index
    %177 = vector.load %arg7[%c0_75, %c0_76] : memref<8x32xf32, #tpu.memory_space<vmem>>, vector<8x32xf32>
    tpu.vector_store %arg7[%c0_75, %c0_76], %176 {strides = array<i32>} : memref<8x32xf32, #tpu.memory_space<vmem>>, vector<8x32xf32>,
    return
  }
  func.func @transform_0(%arg0: i32) -> (i32, i32) {
    %c0_i32 = arith.constant 0 : i32
    %c0_i32_0 = arith.constant 0 : i32
    return %arg0, %c0_i32 : i32, i32
  }
  func.func @transform_1(%arg0: i32) -> (i32, i32) {
    %c0_i32 = arith.constant 0 : i32
    %c0_i32_0 = arith.constant 0 : i32
    return %arg0, %c0_i32 : i32, i32
  }
  func.func @transform_2(%arg0: i32) -> (i32, i32) {
    %c0_i32 = arith.constant 0 : i32
    %c0_i32_0 = arith.constant 0 : i32
    %c0_i32_1 = arith.constant 0 : i32
    return %c0_i32, %c0_i32_0 : i32, i32
  }
  func.func @transform_3(%arg0: i32) -> (i32, i32) {
    %c0_i32 = arith.constant 0 : i32
    %c0_i32_0 = arith.constant 0 : i32
    %c0_i32_1 = arith.constant 0 : i32
    return %c0_i32, %c0_i32_0 : i32, i32
  }
  func.func @transform_4(%arg0: i32) -> (i32, i32, i32) {
    %c0_i32 = arith.constant 0 : i32
    %c0_i32_0 = arith.constant 0 : i32
    %c0_i32_1 = arith.constant 0 : i32
    %c0_i32_2 = arith.constant 0 : i32
    return %c0_i32, %c0_i32_0, %c0_i32_1 : i32, i32, i32
  }
  func.func @transform_5(%arg0: i32) -> (i32, i32) {
    %c0_i32 = arith.constant 0 : i32
    %c0_i32_0 = arith.constant 0 : i32
    %c0_i32_1 = arith.constant 0 : i32
    return %c0_i32, %c0_i32_0 : i32, i32
  }
  func.func @transform_6(%arg0: i32) -> (i32, i32) {
    %c0_i32 = arith.constant 0 : i32
    %c0_i32_0 = arith.constant 0 : i32
    return %arg0, %c0_i32 : i32, i32
  }
}

</mosaic_0001>

<llo_original>
// kernel: tpu_custom_call.1
$region0: #{tpu_custom_call.1}
  #allocation0 [shape = 'u32[]', space=smem, size = 0x4, offset = 0x4, fixed_abs, tag = 'smem constant byte address 0x4 - core index']
  #allocation1 [shape = 'u32[144,128]{1,0:T(1,128)}', space=vmem, size = 0x12000, scoped, tag = 'internal scratch']
  %s0 = inlined_call_operand.vmem [shape: f32[8,6], index: 0, kind: input, shape index: {}]
  %s1 = inlined_call_operand.vmem [shape: f32[8,3], index: 1, kind: input, shape index: {}]
  %s2 = inlined_call_operand.vmem [shape: bf16[6,32], index: 2, kind: input, shape index: {}]
  %s3 = inlined_call_operand.vmem [shape: bf16[3,32], index: 3, kind: input, shape index: {}]
  %s4 = inlined_call_operand.hbm [shape: bf16[5,32,32], index: 4, kind: input, shape index: {}]
  %s5 = inlined_call_operand.vmem [shape: f32[16,32], index: 5, kind: input, shape index: {}]
  %s6 = inlined_call_operand.hbm [shape: f32[8,32], index: 6, kind: output, shape index: {}]
  %s7 = sld [smem:[#allocation0]]
  $region38: #{tpu_custom_call.1} parent=0
    _
  %s9 = ssub.s32 1, %s7
  %s10 = scalar_select 0, %s9, %s7
  $region1: #{tpu_custom_call.1} parent=0
    #allocation2 [shape = 'u8[40960]{0}', space=vmem, size = 0xa000, scoped, tag = 'input window, operand 4, single buffered']
    #allocation3 [shape = 's32[1]{0}', space=sflag, size = 0x4, scoped, tag = 'scoped memory for tpu_custom_call.1']
    #allocation4 [shape = 's32[1]{0}', space=sflag, size = 0x4, scoped, tag = 'scoped memory for tpu_custom_call.1']
    #allocation5 [shape = 'u8[4096]{0}', space=vmem, size = 0x1000, scoped, tag = 'output window, operand 0, single buffered']
    %11 = vsyncpa [#allocation3], 0
    %12 = vsyncpa [#allocation4], 0
    // Predicated region
    $region2: #{tpu_custom_call.1} parent=1 // pred_check
      _
    $region3: #{tpu_custom_call.1} parent=1 // pred_check_branch
      %14 = sbr.rel (0) target = $region5
    $region4: #{tpu_custom_call.1} parent=1 // pred_region
      _
    $region5: #{tpu_custom_call.1} parent=1 // pred_fallthru
      _
    // Predicated region
    $region6: #{tpu_custom_call.1} parent=1 // pred_check
      _
    $region7: #{tpu_custom_call.1} parent=1 // pred_check_branch
      %16 = sbr.rel (0) target = $region9
    $region8: #{tpu_custom_call.1} parent=1 // pred_region
      _
    $region9: #{tpu_custom_call.1} parent=1 // pred_fallthru
      _
    // Predicated region
    $region10: #{tpu_custom_call.1} parent=1 // pred_check
      _
    $region11: #{tpu_custom_call.1} parent=1 // pred_check_branch
      %18 = sbr.rel (0) target = $region13
    $region12: #{tpu_custom_call.1} parent=1 // pred_region
      _
    $region13: #{tpu_custom_call.1} parent=1 // pred_fallthru
      _
    // Predicated region
    $region14: #{tpu_custom_call.1} parent=1 // pred_check
      _
    $region15: #{tpu_custom_call.1} parent=1 // pred_check_branch
      %20 = sbr.rel (0) target = $region17
    $region16: #{tpu_custom_call.1} parent=1 // pred_region
      _
    $region17: #{tpu_custom_call.1} parent=1 // pred_fallthru
      _
    // Predicated region
    $region18: #{tpu_custom_call.1} parent=1 // pred_check
      _
    $region19: #{tpu_custom_call.1} parent=1 // pred_check_branch
      %22 = sbr.rel (0) target = $region21
    $region20: #{tpu_custom_call.1} parent=1 // pred_region
      %s24 = ssub.s32 1280, 1280
      %25 = vsyncadd [#allocation3], %s24
      %s26 = sshll.u32 [#allocation2], 4
      %s27 = int_to_ptr.vmem [resolvable:$true] %s26
      %32 = dma.hbm_to_vmem [thread:$0]  %s4, 1280, %s27, [#allocation3], 64, 64, 4
    $region21: #{tpu_custom_call.1} parent=1 // pred_fallthru
      _
    // Predicated region
    $region22: #{tpu_custom_call.1} parent=1 // pred_check
      _
    $region23: #{tpu_custom_call.1} parent=1 // pred_check_branch
      %34 = sbr.rel (0) target = $region25
    $region24: #{tpu_custom_call.1} parent=1 // pred_region
      _
    $region25: #{tpu_custom_call.1} parent=1 // pred_fallthru
      _
    // Predicated region
    $region26: #{tpu_custom_call.1} parent=1 // pred_check
      _
    $region27: #{tpu_custom_call.1} parent=1 // pred_check_branch
      %36 = sbr.rel (0) target = $region29
    $region28: #{tpu_custom_call.1} parent=1 // pred_region
      %37 = dma.done [#allocation3], 1280
    $region29: #{tpu_custom_call.1} parent=1 // pred_fallthru
      _
    %v39 = vld [vmem:[%s0] sm:$0xff]
    %v40 = vld [vmem:[%s2] sm:$0x7]
    %v41 = vpack.c.bf16 %v39, %v39
    %v42 = vld [vmem:[%s5] sm:$0x1]
    %v43 = vlaneseq
    %v44 = vshrl.u32 %v43, 7
    %v45 = vsub.s32 0, %v44
    %v46 = vrot.slane %v42, %v45
    %vm47 = vcmask 48128
    %v49 = vsel %vm47, %v41, 0
    %vm51 = vcmask 1042432
    %v53 = vsel %vm51, %v40, 0
    %55 = vmatprep.subr.bf16.mxu0 0
    %56 = vmatpush1.bf16.msra.mxu0 %v53
    %57 = vmatprep.subr.bf16.mxu0 0
    %58 = vmatpush1.bf16.msra.mxu0 0
    %59 = vmatprep.subr.bf16.mxu0 0
    %60 = vmatpush1.bf16.msra.mxu0 0
    %61 = vmatprep.subr.bf16.mxu0 0
    %62 = vmatpush1.bf16.msra.mxu0 0
    %63 = vmatprep.subr.bf16.mxu0 0
    %64 = vmatpush1.bf16.msra.mxu0 0
    %65 = vmatprep.subr.bf16.mxu0 0
    %66 = vmatpush1.bf16.msra.mxu0 0
    %67 = vmatprep.subr.bf16.mxu0 0
    %68 = vmatpush1.bf16.msra.mxu0 0
    %69 = vmatprep.subr.bf16.mxu0 0
    %70 = vmatpush1.bf16.msra.mxu0 0
    %71 = vmatprep.subr.bf16.mxu0 0
    %72 = vmatpush1.bf16.msra.mxu0 0
    %73 = vmatprep.subr.bf16.mxu0 0
    %74 = vmatpush1.bf16.msra.mxu0 0
    %75 = vmatprep.subr.bf16.mxu0 0
    %76 = vmatpush1.bf16.msra.mxu0 0
    %77 = vmatprep.subr.bf16.mxu0 0
    %78 = vmatpush1.bf16.msra.mxu0 0
    %79 = vmatprep.subr.bf16.mxu0 0
    %80 = vmatpush1.bf16.msra.mxu0 0
    %81 = vmatprep.subr.bf16.mxu0 0
    %82 = vmatpush1.bf16.msra.mxu0 0
    %83 = vmatprep.subr.bf16.mxu0 0
    %84 = vmatpush1.bf16.msra.mxu0 0
    %85 = vmatprep.subr.bf16.mxu0 0
    %86 = vmatpush1.bf16.msra.mxu0 0
    %87 = vmatprep.mubr.bf16.mxu0 0
    %88 = vmatmul.mubr.bf16.gmra.mrb[0].mxu0 %v49
    %v89 = vpop.f32.mrb[0].mxu0
    %v90 = vadd.f32 %v46, %v89
    %v91 = vpop.f32.mrb[0].mxu0
    %v92 = vpop.f32.mrb[0].mxu0
    %v93 = vpop.f32.mrb[0].mxu0
    %94 = vdwg.mxu0
    %vm95 = vcmask 261120
    %v96 = vsel %vm95, %v90, 0.0
    %97 = vadd.xlane.f32.xlu0 %v96
    %v98 = vpop.xlane.xlu0 %97
    %v99 = vrcp.pop 32.0
    %v100 = vmul.f32 %v98, %v99
    %v101 = vmul.f32 %v90, %v90
    %v102 = vsel %vm95, %v101, 0.0
    %103 = vadd.xlane.f32.xlu0 %v102
    %v104 = vpop.xlane.xlu0 %103
    %v105 = vmul.f32 %v104, %v99
    %v106 = vmul.f32 %v100, %v100
    %v107 = vsub.f32 %v105, %v106
    %v108 = vsub.f32 %v90, %v100
    %v109 = vadd.f32 %v107, 1e-05
    %v110 = vrsqrt.pop %v109
    %v111 = vmul.f32 %v108, %v110
    %v112 = vld [vmem:[%s5 + $0x1] sm:$0x1]
    %v113 = vlaneseq
    %v114 = vshrl.u32 %v113, 7
    %v115 = vsub.s32 0, %v114
    %v116 = vrot.slane %v112, %v115
    %v117 = vmul.f32 %v111, %v116
    %v118 = vld [vmem:[%s5 + $0x2] sm:$0x1]
    %v119 = vlaneseq
    %v120 = vshrl.u32 %v119, 7
    %v121 = vsub.s32 0, %v120
    %v122 = vrot.slane %v118, %v121
    %v123 = vadd.f32 %v117, %v122
    %v124 = vmax.f32 %v123, 0.0
    %v125 = vld [vmem:[%s1] sm:$0xff]
    %v126 = vld [vmem:[%s3] sm:$0x3]
    %v127 = vpack.c.bf16 %v125, %v125
    %v128 = vld [vmem:[%s5 + $0x3] sm:$0x1]
    %v129 = vlaneseq
    %v130 = vshrl.u32 %v129, 7
    %v131 = vsub.s32 0, %v130
    %v132 = vrot.slane %v128, %v131
    %vm133 = vcmask 23552
    %v135 = vsel %vm133, %v127, 0
    %vm137 = vcmask 1040384
    %vm138 = vcmask 1041408
    %v139 = vsel %vm137, 4294967295, 65535
    %v140 = vsel %vm138, %v139, 0
    %v142 = vand.u32 %v126, %v140
    %144 = vmatprep.subr.bf16.mxu0 0
    %145 = vmatpush1.bf16.msra.mxu0 %v142
    %146 = vmatprep.subr.bf16.mxu0 0
    %147 = vmatpush1.bf16.msra.mxu0 0
    %148 = vmatprep.subr.bf16.mxu0 0
    %149 = vmatpush1.bf16.msra.mxu0 0
    %150 = vmatprep.subr.bf16.mxu0 0
    %151 = vmatpush1.bf16.msra.mxu0 0
    %152 = vmatprep.subr.bf16.mxu0 0
    %153 = vmatpush1.bf16.msra.mxu0 0
    %154 = vmatprep.subr.bf16.mxu0 0
    %155 = vmatpush1.bf16.msra.mxu0 0
    %156 = vmatprep.subr.bf16.mxu0 0
    %157 = vmatpush1.bf16.msra.mxu0 0
    %158 = vmatprep.subr.bf16.mxu0 0
    %159 = vmatpush1.bf16.msra.mxu0 0
    %160 = vmatprep.subr.bf16.mxu0 0
    %161 = vmatpush1.bf16.msra.mxu0 0
    %162 = vmatprep.subr.bf16.mxu0 0
    %163 = vmatpush1.bf16.msra.mxu0 0
    %164 = vmatprep.subr.bf16.mxu0 0
    %165 = vmatpush1.bf16.msra.mxu0 0
    %166 = vmatprep.subr.bf16.mxu0 0
    %167 = vmatpush1.bf16.msra.mxu0 0
    %168 = vmatprep.subr.bf16.mxu0 0
    %169 = vmatpush1.bf16.msra.mxu0 0
    %170 = vmatprep.subr.bf16.mxu0 0
    %171 = vmatpush1.bf16.msra.mxu0 0
    %172 = vmatprep.subr.bf16.mxu0 0
    %173 = vmatpush1.bf16.msra.mxu0 0
    %174 = vmatprep.subr.bf16.mxu0 0
    %175 = vmatpush1.bf16.msra.mxu0 0
    %176 = vmatprep.mubr.bf16.mxu0 0
    %177 = vmatmul.mubr.bf16.gmra.mrb[0].mxu0 %v135
    %v178 = vpop.f32.mrb[0].mxu0
    %v179 = vadd.f32 %v132, %v178
    %v180 = vpop.f32.mrb[0].mxu0
    %v181 = vpop.f32.mrb[0].mxu0
    %v182 = vpop.f32.mrb[0].mxu0
    %183 = vdwg.mxu0
    %v184 = vsel %vm95, %v179, 0.0
    %185 = vadd.xlane.f32.xlu0 %v184
    %v186 = vpop.xlane.xlu0 %185
    %v187 = vmul.f32 %v186, %v99
    %v188 = vmul.f32 %v179, %v179
    %v189 = vsel %vm95, %v188, 0.0
    %190 = vadd.xlane.f32.xlu0 %v189
    %v191 = vpop.xlane.xlu0 %190
    %v192 = vmul.f32 %v191, %v99
    %v193 = vmul.f32 %v187, %v187
    %v194 = vsub.f32 %v192, %v193
    %v195 = vsub.f32 %v179, %v187
    %v196 = vadd.f32 %v194, 1e-05
    %v197 = vrsqrt.pop %v196
    %v198 = vmul.f32 %v195, %v197
    %v199 = vld [vmem:[%s5 + $0x4] sm:$0x1]
    %v200 = vlaneseq
    %v201 = vshrl.u32 %v200, 7
    %v202 = vsub.s32 0, %v201
    %v203 = vrot.slane %v199, %v202
    %v204 = vmul.f32 %v198, %v203
    %v205 = vld [vmem:[%s5 + $0x5] sm:$0x1]
    %v206 = vlaneseq
    %v207 = vshrl.u32 %v206, 7
    %v208 = vsub.s32 0, %v207
    %v209 = vrot.slane %v205, %v208
    %v210 = vadd.f32 %v204, %v209
    %v211 = vmax.f32 %v210, 0.0
    %v212 = vld [vmem:[#allocation2] sm:$0xf]
    %v213 = vld [vmem:[#allocation2 + $0x4] sm:$0xf]
    %v214 = vld [vmem:[#allocation2 + $0x8] sm:$0xf]
    %v215 = vld [vmem:[#allocation2 + $0xc] sm:$0xf]
    %v216 = vpack.c.bf16 %v124, %v124
    %s217 = scalar_lea.vmem [#allocation2], 16
    %v218 = vld [vmem:[%s217] sm:$0xf]
    %v219 = vld [vmem:[%s217 + $0x4] sm:$0xf]
    %v220 = vld [vmem:[%s217 + $0x8] sm:$0xf]
    %v221 = vld [vmem:[%s217 + $0xc] sm:$0xf]
    %v222 = vpack.c.bf16 %v211, %v211
    %v227 = vunpack.c.l.b16 %v218
    %v228 = vunpack.c.l.b16 %v219
    %v229 = vunpack.c.l.b16 %v220
    %v230 = vunpack.c.l.b16 %v221
    %v231 = vpack.c.b16 %v228, %v227
    %v232 = vpack.c.b16 %v230, %v229
    %v236 = vsel %vm95, %v222, 0
    %238 = vmatprep.subr.bf16.mxu0 0
    %239 = vmatpush1.bf16.msra.mxu0 %v231
    %240 = vmatprep.subr.bf16.mxu0 0
    %241 = vmatpush1.bf16.msra.mxu0 %v232
    %242 = vmatprep.subr.bf16.mxu0 0
    %243 = vmatpush1.bf16.msra.mxu0 0
    %244 = vmatprep.subr.bf16.mxu0 0
    %245 = vmatpush1.bf16.msra.mxu0 0
    %246 = vmatprep.subr.bf16.mxu0 0
    %247 = vmatpush1.bf16.msra.mxu0 0
    %248 = vmatprep.subr.bf16.mxu0 0
    %249 = vmatpush1.bf16.msra.mxu0 0
    %250 = vmatprep.subr.bf16.mxu0 0
    %251 = vmatpush1.bf16.msra.mxu0 0
    %252 = vmatprep.subr.bf16.mxu0 0
    %253 = vmatpush1.bf16.msra.mxu0 0
    %254 = vmatprep.subr.bf16.mxu0 0
    %255 = vmatpush1.bf16.msra.mxu0 0
    %256 = vmatprep.subr.bf16.mxu0 0
    %257 = vmatpush1.bf16.msra.mxu0 0
    %258 = vmatprep.subr.bf16.mxu0 0
    %259 = vmatpush1.bf16.msra.mxu0 0
    %260 = vmatprep.subr.bf16.mxu0 0
    %261 = vmatpush1.bf16.msra.mxu0 0
    %262 = vmatprep.subr.bf16.mxu0 0
    %263 = vmatpush1.bf16.msra.mxu0 0
    %264 = vmatprep.subr.bf16.mxu0 0
    %265 = vmatpush1.bf16.msra.mxu0 0
    %266 = vmatprep.subr.bf16.mxu0 0
    %267 = vmatpush1.bf16.msra.mxu0 0
    %268 = vmatprep.subr.bf16.mxu0 0
    %269 = vmatpush1.bf16.msra.mxu0 0
    %270 = vmatprep.mubr.bf16.mxu0 0
    %271 = vmatmul.mubr.bf16.gmra.mrb[0].mxu0 %v236
    %v272 = vpop.f32.mrb[0].mxu0
    %v273 = vadd.f32 0.0, %v272
    %v274 = vpop.f32.mrb[0].mxu0
    %v275 = vpop.f32.mrb[0].mxu0
    %v276 = vpop.f32.mrb[0].mxu0
    %277 = vdwg.mxu0
    %v282 = vunpack.c.l.b16 %v212
    %v283 = vunpack.c.l.b16 %v213
    %v284 = vunpack.c.l.b16 %v214
    %v285 = vunpack.c.l.b16 %v215
    %v286 = vpack.c.b16 %v283, %v282
    %v287 = vpack.c.b16 %v285, %v284
    %v291 = vsel %vm95, %v216, 0
    %293 = vmatprep.subr.bf16.mxu0 0
    %294 = vmatpush1.bf16.msra.mxu0 %v286
    %295 = vmatprep.subr.bf16.mxu0 0
    %296 = vmatpush1.bf16.msra.mxu0 %v287
    %297 = vmatprep.subr.bf16.mxu0 0
    %298 = vmatpush1.bf16.msra.mxu0 0
    %299 = vmatprep.subr.bf16.mxu0 0
    %300 = vmatpush1.bf16.msra.mxu0 0
    %301 = vmatprep.subr.bf16.mxu0 0
    %302 = vmatpush1.bf16.msra.mxu0 0
    %303 = vmatprep.subr.bf16.mxu0 0
    %304 = vmatpush1.bf16.msra.mxu0 0
    %305 = vmatprep.subr.bf16.mxu0 0
    %306 = vmatpush1.bf16.msra.mxu0 0
    %307 = vmatprep.subr.bf16.mxu0 0
    %308 = vmatpush1.bf16.msra.mxu0 0
    %309 = vmatprep.subr.bf16.mxu0 0
    %310 = vmatpush1.bf16.msra.mxu0 0
    %311 = vmatprep.subr.bf16.mxu0 0
    %312 = vmatpush1.bf16.msra.mxu0 0
    %313 = vmatprep.subr.bf16.mxu0 0
    %314 = vmatpush1.bf16.msra.mxu0 0
    %315 = vmatprep.subr.bf16.mxu0 0
    %316 = vmatpush1.bf16.msra.mxu0 0
    %317 = vmatprep.subr.bf16.mxu0 0
    %318 = vmatpush1.bf16.msra.mxu0 0
    %319 = vmatprep.subr.bf16.mxu0 0
    %320 = vmatpush1.bf16.msra.mxu0 0
    %321 = vmatprep.subr.bf16.mxu0 0
    %322 = vmatpush1.bf16.msra.mxu0 0
    %323 = vmatprep.subr.bf16.mxu0 0
    %324 = vmatpush1.bf16.msra.mxu0 0
    %325 = vmatprep.mubr.bf16.mxu0 0
    %326 = vmatmul.mubr.bf16.gmra.mrb[0].mxu0 %v291
    %v327 = vpop.f32.mrb[0].mxu0
    %v328 = vadd.f32 %v273, %v327
    %v329 = vpop.f32.mrb[0].mxu0
    %v330 = vpop.f32.mrb[0].mxu0
    %v331 = vpop.f32.mrb[0].mxu0
    %332 = vdwg.mxu0
    %v333 = vld [vmem:[%s5 + $0x6] sm:$0x1]
    %v334 = vlaneseq
    %v335 = vshrl.u32 %v334, 7
    %v336 = vsub.s32 0, %v335
    %v337 = vrot.slane %v333, %v336
    %v338 = vadd.f32 %v328, %v337
    %v339 = vsel %vm95, %v338, 0.0
    %340 = vadd.xlane.f32.xlu0 %v339
    %v341 = vpop.xlane.xlu0 %340
    %v342 = vmul.f32 %v341, %v99
    %v343 = vmul.f32 %v338, %v338
    %v344 = vsel %vm95, %v343, 0.0
    %345 = vadd.xlane.f32.xlu0 %v344
    %v346 = vpop.xlane.xlu0 %345
    %v347 = vmul.f32 %v346, %v99
    %v348 = vmul.f32 %v342, %v342
    %v349 = vsub.f32 %v347, %v348
    %v350 = vsub.f32 %v338, %v342
    %v351 = vadd.f32 %v349, 1e-05
    %v352 = vrsqrt.pop %v351
    %v353 = vmul.f32 %v350, %v352
    %v354 = vld [vmem:[%s5 + $0x7] sm:$0x1]
    %v355 = vlaneseq
    %v356 = vshrl.u32 %v355, 7
    %v357 = vsub.s32 0, %v356
    %v358 = vrot.slane %v354, %v357
    %v359 = vmul.f32 %v353, %v358
    %v360 = vld [vmem:[%s5 + $0x8] sm:$0x1]
    %v361 = vlaneseq
    %v362 = vshrl.u32 %v361, 7
    %v363 = vsub.s32 0, %v362
    %v364 = vrot.slane %v360, %v363
    %v365 = vadd.f32 %v359, %v364
    %v366 = vmax.f32 %v365, 0.0
    %s367 = scalar_lea.vmem [#allocation2], 32
    %v368 = vld [vmem:[%s367] sm:$0xf]
    %v369 = vld [vmem:[%s367 + $0x4] sm:$0xf]
    %v370 = vld [vmem:[%s367 + $0x8] sm:$0xf]
    %v371 = vld [vmem:[%s367 + $0xc] sm:$0xf]
    %v372 = vpack.c.bf16 %v366, %v366
    %v373 = vld [vmem:[%s5 + $0x9] sm:$0x1]
    %v374 = vlaneseq
    %v375 = vshrl.u32 %v374, 7
    %v376 = vsub.s32 0, %v375
    %v377 = vrot.slane %v373, %v376
    %v382 = vunpack.c.l.b16 %v368
    %v383 = vunpack.c.l.b16 %v369
    %v384 = vunpack.c.l.b16 %v370
    %v385 = vunpack.c.l.b16 %v371
    %v386 = vpack.c.b16 %v383, %v382
    %v387 = vpack.c.b16 %v385, %v384
    %v391 = vsel %vm95, %v372, 0
    %393 = vmatprep.subr.bf16.mxu0 0
    %394 = vmatpush1.bf16.msra.mxu0 %v386
    %395 = vmatprep.subr.bf16.mxu0 0
    %396 = vmatpush1.bf16.msra.mxu0 %v387
    %397 = vmatprep.subr.bf16.mxu0 0
    %398 = vmatpush1.bf16.msra.mxu0 0
    %399 = vmatprep.subr.bf16.mxu0 0
    %400 = vmatpush1.bf16.msra.mxu0 0
    %401 = vmatprep.subr.bf16.mxu0 0
    %402 = vmatpush1.bf16.msra.mxu0 0
    %403 = vmatprep.subr.bf16.mxu0 0
    %404 = vmatpush1.bf16.msra.mxu0 0
    %405 = vmatprep.subr.bf16.mxu0 0
    %406 = vmatpush1.bf16.msra.mxu0 0
    %407 = vmatprep.subr.bf16.mxu0 0
    %408 = vmatpush1.bf16.msra.mxu0 0
    %409 = vmatprep.subr.bf16.mxu0 0
    %410 = vmatpush1.bf16.msra.mxu0 0
    %411 = vmatprep.subr.bf16.mxu0 0
    %412 = vmatpush1.bf16.msra.mxu0 0
    %413 = vmatprep.subr.bf16.mxu0 0
    %414 = vmatpush1.bf16.msra.mxu0 0
    %415 = vmatprep.subr.bf16.mxu0 0
    %416 = vmatpush1.bf16.msra.mxu0 0
    %417 = vmatprep.subr.bf16.mxu0 0
    %418 = vmatpush1.bf16.msra.mxu0 0
    %419 = vmatprep.subr.bf16.mxu0 0
    %420 = vmatpush1.bf16.msra.mxu0 0
    %421 = vmatprep.subr.bf16.mxu0 0
    %422 = vmatpush1.bf16.msra.mxu0 0
    %423 = vmatprep.subr.bf16.mxu0 0
    %424 = vmatpush1.bf16.msra.mxu0 0
    %425 = vmatprep.mubr.bf16.mxu0 0
    %426 = vmatmul.mubr.bf16.gmra.mrb[0].mxu0 %v391
    %v427 = vpop.f32.mrb[0].mxu0
    %v428 = vadd.f32 %v377, %v427
    %v429 = vpop.f32.mrb[0].mxu0
    %v430 = vpop.f32.mrb[0].mxu0
    %v431 = vpop.f32.mrb[0].mxu0
    %432 = vdwg.mxu0
    %v433 = vsel %vm95, %v428, 0.0
    %434 = vadd.xlane.f32.xlu0 %v433
    %v435 = vpop.xlane.xlu0 %434
    %v436 = vmul.f32 %v435, %v99
    %v437 = vmul.f32 %v428, %v428
    %v438 = vsel %vm95, %v437, 0.0
    %439 = vadd.xlane.f32.xlu0 %v438
    %v440 = vpop.xlane.xlu0 %439
    %v441 = vmul.f32 %v440, %v99
    %v442 = vmul.f32 %v436, %v436
    %v443 = vsub.f32 %v441, %v442
    %v444 = vsub.f32 %v428, %v436
    %v445 = vadd.f32 %v443, 1e-05
    %v446 = vrsqrt.pop %v445
    %v447 = vmul.f32 %v444, %v446
    %v448 = vld [vmem:[%s5 + $0xa] sm:$0x1]
    %v449 = vlaneseq
    %v450 = vshrl.u32 %v449, 7
    %v451 = vsub.s32 0, %v450
    %v452 = vrot.slane %v448, %v451
    %v453 = vmul.f32 %v447, %v452
    %v454 = vld [vmem:[%s5 + $0xb] sm:$0x1]
    %v455 = vlaneseq
    %v456 = vshrl.u32 %v455, 7
    %v457 = vsub.s32 0, %v456
    %v458 = vrot.slane %v454, %v457
    %v459 = vadd.f32 %v453, %v458
    %v460 = vmax.f32 %v459, 0.0
    %s461 = scalar_lea.vmem [#allocation2], 48
    %v462 = vld [vmem:[%s461] sm:$0xf]
    %v463 = vld [vmem:[%s461 + $0x4] sm:$0xf]
    %v464 = vld [vmem:[%s461 + $0x8] sm:$0xf]
    %v465 = vld [vmem:[%s461 + $0xc] sm:$0xf]
    %v466 = vpack.c.bf16 %v460, %v460
    %v467 = vld [vmem:[%s5 + $0xc] sm:$0x1]
    %v468 = vlaneseq
    %v469 = vshrl.u32 %v468, 7
    %v470 = vsub.s32 0, %v469
    %v471 = vrot.slane %v467, %v470
    %v476 = vunpack.c.l.b16 %v462
    %v477 = vunpack.c.l.b16 %v463
    %v478 = vunpack.c.l.b16 %v464
    %v479 = vunpack.c.l.b16 %v465
    %v480 = vpack.c.b16 %v477, %v476
    %v481 = vpack.c.b16 %v479, %v478
    %v485 = vsel %vm95, %v466, 0
    %487 = vmatprep.subr.bf16.mxu0 0
    %488 = vmatpush1.bf16.msra.mxu0 %v480
    %489 = vmatprep.subr.bf16.mxu0 0
    %490 = vmatpush1.bf16.msra.mxu0 %v481
    %491 = vmatprep.subr.bf16.mxu0 0
    %492 = vmatpush1.bf16.msra.mxu0 0
    %493 = vmatprep.subr.bf16.mxu0 0
    %494 = vmatpush1.bf16.msra.mxu0 0
    %495 = vmatprep.subr.bf16.mxu0 0
    %496 = vmatpush1.bf16.msra.mxu0 0
    %497 = vmatprep.subr.bf16.mxu0 0
    %498 = vmatpush1.bf16.msra.mxu0 0
    %499 = vmatprep.subr.bf16.mxu0 0
    %500 = vmatpush1.bf16.msra.mxu0 0
    %501 = vmatprep.subr.bf16.mxu0 0
    %502 = vmatpush1.bf16.msra.mxu0 0
    %503 = vmatprep.subr.bf16.mxu0 0
    %504 = vmatpush1.bf16.msra.mxu0 0
    %505 = vmatprep.subr.bf16.mxu0 0
    %506 = vmatpush1.bf16.msra.mxu0 0
    %507 = vmatprep.subr.bf16.mxu0 0
    %508 = vmatpush1.bf16.msra.mxu0 0
    %509 = vmatprep.subr.bf16.mxu0 0
    %510 = vmatpush1.bf16.msra.mxu0 0
    %511 = vmatprep.subr.bf16.mxu0 0
    %512 = vmatpush1.bf16.msra.mxu0 0
    %513 = vmatprep.subr.bf16.mxu0 0
    %514 = vmatpush1.bf16.msra.mxu0 0
    %515 = vmatprep.subr.bf16.mxu0 0
    %516 = vmatpush1.bf16.msra.mxu0 0
    %517 = vmatprep.subr.bf16.mxu0 0
    %518 = vmatpush1.bf16.msra.mxu0 0
    %519 = vmatprep.mubr.bf16.mxu0 0
    %520 = vmatmul.mubr.bf16.gmra.mrb[0].mxu0 %v485
    %v521 = vpop.f32.mrb[0].mxu0
    %v522 = vadd.f32 %v471, %v521
    %v523 = vpop.f32.mrb[0].mxu0
    %v524 = vpop.f32.mrb[0].mxu0
    %v525 = vpop.f32.mrb[0].mxu0
    %526 = vdwg.mxu0
    %v527 = vsel %vm95, %v522, 0.0
    %528 = vadd.xlane.f32.xlu0 %v527
    %v529 = vpop.xlane.xlu0 %528
    %v530 = vmul.f32 %v529, %v99
    %v531 = vmul.f32 %v522, %v522
    %v532 = vsel %vm95, %v531, 0.0
    %533 = vadd.xlane.f32.xlu0 %v532
    %v534 = vpop.xlane.xlu0 %533
    %v535 = vmul.f32 %v534, %v99
    %v536 = vmul.f32 %v530, %v530
    %v537 = vsub.f32 %v535, %v536
    %v538 = vsub.f32 %v522, %v530
    %v539 = vadd.f32 %v537, 1e-05
    %v540 = vrsqrt.pop %v539
    %v541 = vmul.f32 %v538, %v540
    %v542 = vld [vmem:[%s5 + $0xd] sm:$0x1]
    %v543 = vlaneseq
    %v544 = vshrl.u32 %v543, 7
    %v545 = vsub.s32 0, %v544
    %v546 = vrot.slane %v542, %v545
    %v547 = vmul.f32 %v541, %v546
    %v548 = vld [vmem:[%s5 + $0xe] sm:$0x1]
    %v549 = vlaneseq
    %v550 = vshrl.u32 %v549, 7
    %v551 = vsub.s32 0, %v550
    %v552 = vrot.slane %v548, %v551
    %v553 = vadd.f32 %v547, %v552
    %v554 = vmax.f32 %v553, 0.0
    %s555 = scalar_lea.vmem [#allocation2], 64
    %v556 = vld [vmem:[%s555] sm:$0xf]
    %v557 = vld [vmem:[%s555 + $0x4] sm:$0xf]
    %v558 = vld [vmem:[%s555 + $0x8] sm:$0xf]
    %v559 = vld [vmem:[%s555 + $0xc] sm:$0xf]
    %v560 = vpack.c.bf16 %v554, %v554
    %v561 = vld [vmem:[%s5 + $0xf] sm:$0x1]
    %v562 = vlaneseq
    %v563 = vshrl.u32 %v562, 7
    %v564 = vsub.s32 0, %v563
    %v565 = vrot.slane %v561, %v564
    %v570 = vunpack.c.l.b16 %v556
    %v571 = vunpack.c.l.b16 %v557
    %v572 = vunpack.c.l.b16 %v558
    %v573 = vunpack.c.l.b16 %v559
    %v574 = vpack.c.b16 %v571, %v570
    %v575 = vpack.c.b16 %v573, %v572
    %v579 = vsel %vm95, %v560, 0
    %581 = vmatprep.subr.bf16.mxu0 0
    %582 = vmatpush1.bf16.msra.mxu0 %v574
    %583 = vmatprep.subr.bf16.mxu0 0
    %584 = vmatpush1.bf16.msra.mxu0 %v575
    %585 = vmatprep.subr.bf16.mxu0 0
    %586 = vmatpush1.bf16.msra.mxu0 0
    %587 = vmatprep.subr.bf16.mxu0 0
    %588 = vmatpush1.bf16.msra.mxu0 0
    %589 = vmatprep.subr.bf16.mxu0 0
    %590 = vmatpush1.bf16.msra.mxu0 0
    %591 = vmatprep.subr.bf16.mxu0 0
    %592 = vmatpush1.bf16.msra.mxu0 0
    %593 = vmatprep.subr.bf16.mxu0 0
    %594 = vmatpush1.bf16.msra.mxu0 0
    %595 = vmatprep.subr.bf16.mxu0 0
    %596 = vmatpush1.bf16.msra.mxu0 0
    %597 = vmatprep.subr.bf16.mxu0 0
    %598 = vmatpush1.bf16.msra.mxu0 0
    %599 = vmatprep.subr.bf16.mxu0 0
    %600 = vmatpush1.bf16.msra.mxu0 0
    %601 = vmatprep.subr.bf16.mxu0 0
    %602 = vmatpush1.bf16.msra.mxu0 0
    %603 = vmatprep.subr.bf16.mxu0 0
    %604 = vmatpush1.bf16.msra.mxu0 0
    %605 = vmatprep.subr.bf16.mxu0 0
    %606 = vmatpush1.bf16.msra.mxu0 0
    %607 = vmatprep.subr.bf16.mxu0 0
    %608 = vmatpush1.bf16.msra.mxu0 0
    %609 = vmatprep.subr.bf16.mxu0 0
    %610 = vmatpush1.bf16.msra.mxu0 0
    %611 = vmatprep.subr.bf16.mxu0 0
    %612 = vmatpush1.bf16.msra.mxu0 0
    %613 = vmatprep.mubr.bf16.mxu0 0
    %614 = vmatmul.mubr.bf16.gmra.mrb[0].mxu0 %v579
    %v615 = vpop.f32.mrb[0].mxu0
    %v616 = vadd.f32 %v565, %v615
    %v617 = vpop.f32.mrb[0].mxu0
    %v618 = vpop.f32.mrb[0].mxu0
    %v619 = vpop.f32.mrb[0].mxu0
    %620 = vdwg.mxu0
    %621 = vst.msk [vmem:[#allocation5] sm:$0xff] %vm95, %v616
    // Predicated region
    $region30: #{tpu_custom_call.1} parent=1 // pred_check
      _
    $region31: #{tpu_custom_call.1} parent=1 // pred_check_branch
      %623 = sbr.rel (0) target = $region33
    $region32: #{tpu_custom_call.1} parent=1 // pred_region
      %s625 = ssub.s32 128, 128
      %626 = vsyncadd [#allocation4], %s625
      %s628 = sshll.u32 [#allocation5], 4
      %s629 = int_to_ptr.vmem [resolvable:$true] %s628
      %631 = dma.vmem_to_hbm [thread:$0]  %s629, 128, %s6, [#allocation4]
    $region33: #{tpu_custom_call.1} parent=1 // pred_fallthru
      _
    // Predicated region
    $region34: #{tpu_custom_call.1} parent=1 // pred_check
      _
    $region35: #{tpu_custom_call.1} parent=1 // pred_check_branch
      %633 = sbr.rel (0) target = $region37
    $region36: #{tpu_custom_call.1} parent=1 // pred_region
      %634 = dma.done [#allocation4], 128
    $region37: #{tpu_custom_call.1} parent=1 // pred_fallthru
      _
    %635 = vsyncpa [#allocation3], 1
    %636 = vsyncpa [#allocation4], 1

// kernel: tpu_custom_call.1
$region0: #{tpu_custom_call.1}
  #allocation0 [shape = 'u32[]', space=smem, size = 0x4, offset = 0x4, fixed_abs, tag = 'smem constant byte address 0x4 - core index']
  #allocation1 [shape = 'u32[144,128]{1,0:T(1,128)}', space=vmem, size = 0x12000, scoped, tag = 'internal scratch']
  %s0 = inlined_call_operand.vmem [shape: f32[8,6], index: 0, kind: input, shape index: {}]
  %s1 = inlined_call_operand.vmem [shape: f32[8,3], index: 1, kind: input, shape index: {}]
  %s2 = inlined_call_operand.vmem [shape: bf16[6,32], index: 2, kind: input, shape index: {}]
  %s3 = inlined_call_operand.vmem [shape: bf16[3,32], index: 3, kind: input, shape index: {}]
  %s4 = inlined_call_operand.hbm [shape: bf16[5,32,32], index: 4, kind: input, shape index: {}]
  %s5 = inlined_call_operand.vmem [shape: f32[16,32], index: 5, kind: input, shape index: {}]
  %s6 = inlined_call_operand.hbm [shape: f32[8,32], index: 6, kind: output, shape index: {}]
  %s7 = sld [smem:[#allocation0]]
  $region38: #{tpu_custom_call.1} parent=0
    _
  %s9 = ssub.s32 1, %s7
  %s10 = scalar_select 0, %s9, %s7
  $region1: #{tpu_custom_call.1} parent=0
    #allocation2 [shape = 'u8[40960]{0}', space=vmem, size = 0xa000, scoped, tag = 'input window, operand 4, single buffered']
    #allocation3 [shape = 's32[1]{0}', space=sflag, size = 0x4, scoped, tag = 'scoped memory for tpu_custom_call.1']
    #allocation4 [shape = 's32[1]{0}', space=sflag, size = 0x4, scoped, tag = 'scoped memory for tpu_custom_call.1']
    #allocation5 [shape = 'u8[4096]{0}', space=vmem, size = 0x1000, scoped, tag = 'output window, operand 0, single buffered']
    %11 = vsyncpa [#allocation3], 0
    %12 = vsyncpa [#allocation4], 0
    // Predicated region
    $region2: #{tpu_custom_call.1} parent=1 // pred_check
      _
    $region3: #{tpu_custom_call.1} parent=1 // pred_check_branch
      %14 = sbr.rel (0) target = $region5
    $region4: #{tpu_custom_call.1} parent=1 // pred_region
      _
    $region5: #{tpu_custom_call.1} parent=1 // pred_fallthru
      _
    // Predicated region
    $region6: #{tpu_custom_call.1} parent=1 // pred_check
      _
    $region7: #{tpu_custom_call.1} parent=1 // pred_check_branch
      %16 = sbr.rel (0) target = $region9
    $region8: #{tpu_custom_call.1} parent=1 // pred_region
      _
    $region9: #{tpu_custom_call.1} parent=1 // pred_fallthru
      _
    // Predicated region
    $region10: #{tpu_custom_call.1} parent=1 // pred_check
      _
    $region11: #{tpu_custom_call.1} parent=1 // pred_check_branch
      %18 = sbr.rel (0) target = $region13
    $region12: #{tpu_custom_call.1} parent=1 // pred_region
      _
    $region13: #{tpu_custom_call.1} parent=1 // pred_fallthru
      _
    // Predicated region
    $region14: #{tpu_custom_call.1} parent=1 // pred_check
      _
    $region15: #{tpu_custom_call.1} parent=1 // pred_check_branch
      %20 = sbr.rel (0) target = $region17
    $region16: #{tpu_custom_call.1} parent=1 // pred_region
      _
    $region17: #{tpu_custom_call.1} parent=1 // pred_fallthru
      _
    // Predicated region
    $region18: #{tpu_custom_call.1} parent=1 // pred_check
      _
    $region19: #{tpu_custom_call.1} parent=1 // pred_check_branch
      %22 = sbr.rel (0) target = $region21
    $region20: #{tpu_custom_call.1} parent=1 // pred_region
      %s24 = ssub.s32 1280, 1280
      %25 = vsyncadd [#allocation3], %s24
      %s26 = sshll.u32 [#allocation2], 4
      %s27 = int_to_ptr.vmem [resolvable:$true] %s26
      %32 = dma.hbm_to_vmem [thread:$0]  %s4, 1280, %s27, [#allocation3], 64, 64, 4
    $region21: #{tpu_custom_call.1} parent=1 // pred_fallthru
      _
    // Predicated region
    $region22: #{tpu_custom_call.1} parent=1 // pred_check
      _
    $region23: #{tpu_custom_call.1} parent=1 // pred_check_branch
      %34 = sbr.rel (0) target = $region25
    $region24: #{tpu_custom_call.1} parent=1 // pred_region
      _
    $region25: #{tpu_custom_call.1} parent=1 // pred_fallthru
      _
    // Predicated region
    $region26: #{tpu_custom_call.1} parent=1 // pred_check
      _
    $region27: #{tpu_custom_call.1} parent=1 // pred_check_branch
      %36 = sbr.rel (0) target = $region29
    $region28: #{tpu_custom_call.1} parent=1 // pred_region
      %37 = dma.done [#allocation3], 1280
    $region29: #{tpu_custom_call.1} parent=1 // pred_fallthru
      _
    %v39 = vld [vmem:[%s0] sm:$0xff]
    %v40 = vld [vmem:[%s2] sm:$0x7]
    %v41 = vpack.c.bf16 %v39, %v39
    %v42 = vld [vmem:[%s5] sm:$0x1]
    %v43 = vlaneseq
    %v44 = vshrl.u32 %v43, 7
    %v45 = vsub.s32 0, %v44
    %v46 = vrot.slane %v42, %v45
    %vm47 = vcmask 48128
    %v49 = vsel %vm47, %v41, 0
    %vm51 = vcmask 1042432
    %v53 = vsel %vm51, %v40, 0
    %55 = vmatprep.subr.bf16.mxu0 0
    %56 = vmatpush1.bf16.msra.mxu0 %v53
    %57 = vmatprep.subr.bf16.mxu0 0
    %58 = vmatpush1.bf16.msra.mxu0 0
    %59 = vmatprep.subr.bf16.mxu0 0
    %60 = vmatpush1.bf16.msra.mxu0 0
    %61 = vmatprep.subr.bf16.mxu0 0
    %62 = vmatpush1.bf16.msra.mxu0 0
    %63 = vmatprep.subr.bf16.mxu0 0
    %64 = vmatpush1.bf16.msra.mxu0 0
    %65 = vmatprep.subr.bf16.mxu0 0
    %66 = vmatpush1.bf16.msra.mxu0 0
    %67 = vmatprep.subr.bf16.mxu0 0
    %68 = vmatpush1.bf16.msra.mxu0 0
    %69 = vmatprep.subr.bf16.mxu0 0
    %70 = vmatpush1.bf16.msra.mxu0 0
    %71 = vmatprep.subr.bf16.mxu0 0
    %72 = vmatpush1.bf16.msra.mxu0 0
    %73 = vmatprep.subr.bf16.mxu0 0
    %74 = vmatpush1.bf16.msra.mxu0 0
    %75 = vmatprep.subr.bf16.mxu0 0
    %76 = vmatpush1.bf16.msra.mxu0 0
    %77 = vmatprep.subr.bf16.mxu0 0
    %78 = vmatpush1.bf16.msra.mxu0 0
    %79 = vmatprep.subr.bf16.mxu0 0
    %80 = vmatpush1.bf16.msra.mxu0 0
    %81 = vmatprep.subr.bf16.mxu0 0
    %82 = vmatpush1.bf16.msra.mxu0 0
    %83 = vmatprep.subr.bf16.mxu0 0
    %84 = vmatpush1.bf16.msra.mxu0 0
    %85 = vmatprep.subr.bf16.mxu0 0
    %86 = vmatpush1.bf16.msra.mxu0 0
    %87 = vmatprep.mubr.bf16.mxu0 0
    %88 = vmatmul.mubr.bf16.gmra.mrb[0].mxu0 %v49
    %v89 = vpop.f32.mrb[0].mxu0
    %v90 = vadd.f32 %v46, %v89
    %v91 = vpop.f32.mrb[0].mxu0
    %v92 = vpop.f32.mrb[0].mxu0
    %v93 = vpop.f32.mrb[0].mxu0
    %94 = vdwg.mxu0
    %vm95 = vcmask 261120
    %v96 = vsel %vm95, %v90, 0.0
    %97 = vadd.xlane.f32.xlu0 %v96
    %v98 = vpop.xlane.xlu0 %97
    %v99 = vrcp.pop 32.0
    %v100 = vmul.f32 %v98, %v99
    %v101 = vmul.f32 %v90, %v90
    %v102 = vsel %vm95, %v101, 0.0
    %103 = vadd.xlane.f32.xlu0 %v102
    %v104 = vpop.xlane.xlu0 %103
    %v105 = vmul.f32 %v104, %v99
    %v106 = vmul.f32 %v100, %v100
    %v107 = vsub.f32 %v105, %v106
    %v108 = vsub.f32 %v90, %v100
    %v109 = vadd.f32 %v107, 1e-05
    %v110 = vrsqrt.pop %v109
    %v111 = vmul.f32 %v108, %v110
    %v112 = vld [vmem:[%s5 + $0x1] sm:$0x1]
    %v113 = vlaneseq
    %v114 = vshrl.u32 %v113, 7
    %v115 = vsub.s32 0, %v114
    %v116 = vrot.slane %v112, %v115
    %v117 = vmul.f32 %v111, %v116
    %v118 = vld [vmem:[%s5 + $0x2] sm:$0x1]
    %v119 = vlaneseq
    %v120 = vshrl.u32 %v119, 7
    %v121 = vsub.s32 0, %v120
    %v122 = vrot.slane %v118, %v121
    %v123 = vadd.f32 %v117, %v122
    %v124 = vmax.f32 %v123, 0.0
    %v125 = vld [vmem:[%s1] sm:$0xff]
    %v126 = vld [vmem:[%s3] sm:$0x3]
    %v127 = vpack.c.bf16 %v125, %v125
    %v128 = vld [vmem:[%s5 + $0x3] sm:$0x1]
    %v129 = vlaneseq
    %v130 = vshrl.u32 %v129, 7
    %v131 = vsub.s32 0, %v130
    %v132 = vrot.slane %v128, %v131
    %vm133 = vcmask 23552
    %v135 = vsel %vm133, %v127, 0
    %vm137 = vcmask 1040384
    %vm138 = vcmask 1041408
    %v139 = vsel %vm137, 4294967295, 65535
    %v140 = vsel %vm138, %v139, 0
    %v142 = vand.u32 %v126, %v140
    %144 = vmatprep.subr.bf16.mxu0 0
    %145 = vmatpush1.bf16.msra.mxu0 %v142
    %146 = vmatprep.subr.bf16.mxu0 0
    %147 = vmatpush1.bf16.msra.mxu0 0
    %148 = vmatprep.subr.bf16.mxu0 0
    %149 = vmatpush1.bf16.msra.mxu0 0
    %150 = vmatprep.subr.bf16.mxu0 0
    %151 = vmatpush1.bf16.msra.mxu0 0
    %152 = vmatprep.subr.bf16.mxu0 0
    %153 = vmatpush1.bf16.msra.mxu0 0
    %154 = vmatprep.subr.bf16.mxu0 0
    %155 = vmatpush1.bf16.msra.mxu0 0
    %156 = vmatprep.subr.bf16.mxu0 0
    %157 = vmatpush1.bf16.msra.mxu0 0
    %158 = vmatprep.subr.bf16.mxu0 0
    %159 = vmatpush1.bf16.msra.mxu0 0
    %160 = vmatprep.subr.bf16.mxu0 0
    %161 = vmatpush1.bf16.msra.mxu0 0
    %162 = vmatprep.subr.bf16.mxu0 0
    %163 = vmatpush1.bf16.msra.mxu0 0
    %164 = vmatprep.subr.bf16.mxu0 0
    %165 = vmatpush1.bf16.msra.mxu0 0
    %166 = vmatprep.subr.bf16.mxu0 0
    %167 = vmatpush1.bf16.msra.mxu0 0
    %168 = vmatprep.subr.bf16.mxu0 0
    %169 = vmatpush1.bf16.msra.mxu0 0
    %170 = vmatprep.subr.bf16.mxu0 0
    %171 = vmatpush1.bf16.msra.mxu0 0
    %172 = vmatprep.subr.bf16.mxu0 0
    %173 = vmatpush1.bf16.msra.mxu0 0
    %174 = vmatprep.subr.bf16.mxu0 0
    %175 = vmatpush1.bf16.msra.mxu0 0
    %176 = vmatprep.mubr.bf16.mxu0 0
    %177 = vmatmul.mubr.bf16.gmra.mrb[0].mxu0 %v135
    %v178 = vpop.f32.mrb[0].mxu0
    %v179 = vadd.f32 %v132, %v178
    %v180 = vpop.f32.mrb[0].mxu0
    %v181 = vpop.f32.mrb[0].mxu0
    %v182 = vpop.f32.mrb[0].mxu0
    %183 = vdwg.mxu0
    %v184 = vsel %vm95, %v179, 0.0
    %185 = vadd.xlane.f32.xlu0 %v184
    %v186 = vpop.xlane.xlu0 %185
    %v187 = vmul.f32 %v186, %v99
    %v188 = vmul.f32 %v179, %v179
    %v189 = vsel %vm95, %v188, 0.0
    %190 = vadd.xlane.f32.xlu0 %v189
    %v191 = vpop.xlane.xlu0 %190
    %v192 = vmul.f32 %v191, %v99
    %v193 = vmul.f32 %v187, %v187
    %v194 = vsub.f32 %v192, %v193
    %v195 = vsub.f32 %v179, %v187
    %v196 = vadd.f32 %v194, 1e-05
    %v197 = vrsqrt.pop %v196
    %v198 = vmul.f32 %v195, %v197
    %v199 = vld [vmem:[%s5 + $0x4] sm:$0x1]
    %v200 = vlaneseq
    %v201 = vshrl.u32 %v200, 7
    %v202 = vsub.s32 0, %v201
    %v203 = vrot.slane %v199, %v202
    %v204 = vmul.f32 %v198, %v203
    %v205 = vld [vmem:[%s5 + $0x5] sm:$0x1]
    %v206 = vlaneseq
    %v207 = vshrl.u32 %v206, 7
    %v208 = vsub.s32 0, %v207
    %v209 = vrot.slane %v205, %v208
    %v210 = vadd.f32 %v204, %v209
    %v211 = vmax.f32 %v210, 0.0
    %v212 = vld [vmem:[#allocation2] sm:$0xf]
    %v213 = vld [vmem:[#allocation2 + $0x4] sm:$0xf]
    %v214 = vld [vmem:[#allocation2 + $0x8] sm:$0xf]
    %v215 = vld [vmem:[#allocation2 + $0xc] sm:$0xf]
    %v216 = vpack.c.bf16 %v124, %v124
    %s217 = scalar_lea.vmem [#allocation2], 16
    %v218 = vld [vmem:[%s217] sm:$0xf]
    %v219 = vld [vmem:[%s217 + $0x4] sm:$0xf]
    %v220 = vld [vmem:[%s217 + $0x8] sm:$0xf]
    %v221 = vld [vmem:[%s217 + $0xc] sm:$0xf]
    %v222 = vpack.c.bf16 %v211, %v211
    %v227 = vunpack.c.l.b16 %v218
    %v228 = vunpack.c.l.b16 %v219
    %v229 = vunpack.c.l.b16 %v220
    %v230 = vunpack.c.l.b16 %v221
    %v231 = vpack.c.b16 %v228, %v227
    %v232 = vpack.c.b16 %v230, %v229
    %v236 = vsel %vm95, %v222, 0
    %238 = vmatprep.subr.bf16.mxu0 0
    %239 = vmatpush1.bf16.msra.mxu0 %v231
    %240 = vmatprep.subr.bf16.mxu0 0
    %241 = vmatpush1.bf16.msra.mxu0 %v232
    %242 = vmatprep.subr.bf16.mxu0 0
    %243 = vmatpush1.bf16.msra.mxu0 0
    %244 = vmatprep.subr.bf16.mxu0 0
    %245 = vmatpush1.bf16.msra.mxu0 0
    %246 = vmatprep.subr.bf16.mxu0 0
    %247 = vmatpush1.bf16.msra.mxu0 0
    %248 = vmatprep.subr.bf16.mxu0 0
    %249 = vmatpush1.bf16.msra.mxu0 0
    %250 = vmatprep.subr.bf16.mxu0 0
    %251 = vmatpush1.bf16.msra.mxu0 0
    %252 = vmatprep.subr.bf16.mxu0 0
    %253 = vmatpush1.bf16.msra.mxu0 0
    %254 = vmatprep.subr.bf16.mxu0 0
    %255 = vmatpush1.bf16.msra.mxu0 0
    %256 = vmatprep.subr.bf16.mxu0 0
    %257 = vmatpush1.bf16.msra.mxu0 0
    %258 = vmatprep.subr.bf16.mxu0 0
    %259 = vmatpush1.bf16.msra.mxu0 0
    %260 = vmatprep.subr.bf16.mxu0 0
    %261 = vmatpush1.bf16.msra.mxu0 0
    %262 = vmatprep.subr.bf16.mxu0 0
    %263 = vmatpush1.bf16.msra.mxu0 0
    %264 = vmatprep.subr.bf16.mxu0 0
    %265 = vmatpush1.bf16.msra.mxu0 0
    %266 = vmatprep.subr.bf16.mxu0 0
    %267 = vmatpush1.bf16.msra.mxu0 0
    %268 = vmatprep.subr.bf16.mxu0 0
    %269 = vmatpush1.bf16.msra.mxu0 0
    %270 = vmatprep.mubr.bf16.mxu0 0
    %271 = vmatmul.mubr.bf16.gmra.mrb[0].mxu0 %v236
    %v272 = vpop.f32.mrb[0].mxu0
    %v273 = vadd.f32 0.0, %v272
    %v274 = vpop.f32.mrb[0].mxu0
    %v275 = vpop.f32.mrb[0].mxu0
    %v276 = vpop.f32.mrb[0].mxu0
    %277 = vdwg.mxu0
    %v282 = vunpack.c.l.b16 %v212
    %v283 = vunpack.c.l.b16 %v213
    %v284 = vunpack.c.l.b16 %v214
    %v285 = vunpack.c.l.b16 %v215
    %v286 = vpack.c.b16 %v283, %v282
    %v287 = vpack.c.b16 %v285, %v284
    %v291 = vsel %vm95, %v216, 0
    %293 = vmatprep.subr.bf16.mxu0 0
    %294 = vmatpush1.bf16.msra.mxu0 %v286
    %295 = vmatprep.subr.bf16.mxu0 0
    %296 = vmatpush1.bf16.msra.mxu0 %v287
    %297 = vmatprep.subr.bf16.mxu0 0
    %298 = vmatpush1.bf16.msra.mxu0 0
    %299 = vmatprep.subr.bf16.mxu0 0
    %300 = vmatpush1.bf16.msra.mxu0 0
    %301 = vmatprep.subr.bf16.mxu0 0
    %302 = vmatpush1.bf16.msra.mxu0 0
    %303 = vmatprep.subr.bf16.mxu0 0
    %304 = vmatpush1.bf16.msra.mxu0 0
    %305 = vmatprep.subr.bf16.mxu0 0
    %306 = vmatpush1.bf16.msra.mxu0 0
    %307 = vmatprep.subr.bf16.mxu0 0
    %308 = vmatpush1.bf16.msra.mxu0 0
    %309 = vmatprep.subr.bf16.mxu0 0
    %310 = vmatpush1.bf16.msra.mxu0 0
    %311 = vmatprep.subr.bf16.mxu0 0
    %312 = vmatpush1.bf16.msra.mxu0 0
    %313 = vmatprep.subr.bf16.mxu0 0
    %314 = vmatpush1.bf16.msra.mxu0 0
    %315 = vmatprep.subr.bf16.mxu0 0
    %316 = vmatpush1.bf16.msra.mxu0 0
    %317 = vmatprep.subr.bf16.mxu0 0
    %318 = vmatpush1.bf16.msra.mxu0 0
    %319 = vmatprep.subr.bf16.mxu0 0
    %320 = vmatpush1.bf16.msra.mxu0 0
    %321 = vmatprep.subr.bf16.mxu0 0
    %322 = vmatpush1.bf16.msra.mxu0 0
    %323 = vmatprep.subr.bf16.mxu0 0
    %324 = vmatpush1.bf16.msra.mxu0 0
    %325 = vmatprep.mubr.bf16.mxu0 0
    %326 = vmatmul.mubr.bf16.gmra.mrb[0].mxu0 %v291
    %v327 = vpop.f32.mrb[0].mxu0
    %v328 = vadd.f32 %v273, %v327
    %v329 = vpop.f32.mrb[0].mxu0
    %v330 = vpop.f32.mrb[0].mxu0
    %v331 = vpop.f32.mrb[0].mxu0
    %332 = vdwg.mxu0
    %v333 = vld [vmem:[%s5 + $0x6] sm:$0x1]
    %v334 = vlaneseq
    %v335 = vshrl.u32 %v334, 7
    %v336 = vsub.s32 0, %v335
    %v337 = vrot.slane %v333, %v336
    %v338 = vadd.f32 %v328, %v337
    %v339 = vsel %vm95, %v338, 0.0
    %340 = vadd.xlane.f32.xlu0 %v339
    %v341 = vpop.xlane.xlu0 %340
    %v342 = vmul.f32 %v341, %v99
    %v343 = vmul.f32 %v338, %v338
    %v344 = vsel %vm95, %v343, 0.0
    %345 = vadd.xlane.f32.xlu0 %v344
    %v346 = vpop.xlane.xlu0 %345
    %v347 = vmul.f32 %v346, %v99
    %v348 = vmul.f32 %v342, %v342
    %v349 = vsub.f32 %v347, %v348
    %v350 = vsub.f32 %v338, %v342
    %v351 = vadd.f32 %v349, 1e-05
    %v352 = vrsqrt.pop %v351
    %v353 = vmul.f32 %v350, %v352
    %v354 = vld [vmem:[%s5 + $0x7] sm:$0x1]
    %v355 = vlaneseq
    %v356 = vshrl.u32 %v355, 7
    %v357 = vsub.s32 0, %v356
    %v358 = vrot.slane %v354, %v357
    %v359 = vmul.f32 %v353, %v358
    %v360 = vld [vmem:[%s5 + $0x8] sm:$0x1]
    %v361 = vlaneseq
    %v362 = vshrl.u32 %v361, 7
    %v363 = vsub.s32 0, %v362
    %v364 = vrot.slane %v360, %v363
    %v365 = vadd.f32 %v359, %v364
    %v366 = vmax.f32 %v365, 0.0
    %s367 = scalar_lea.vmem [#allocation2], 32
    %v368 = vld [vmem:[%s367] sm:$0xf]
    %v369 = vld [vmem:[%s367 + $0x4] sm:$0xf]
    %v370 = vld [vmem:[%s367 + $0x8] sm:$0xf]
    %v371 = vld [vmem:[%s367 + $0xc] sm:$0xf]
    %v372 = vpack.c.bf16 %v366, %v366
    %v373 = vld [vmem:[%s5 + $0x9] sm:$0x1]
    %v374 = vlaneseq
    %v375 = vshrl.u32 %v374, 7
    %v376 = vsub.s32 0, %v375
    %v377 = vrot.slane %v373, %v376
    %v382 = vunpack.c.l.b16 %v368
    %v383 = vunpack.c.l.b16 %v369
    %v384 = vunpack.c.l.b16 %v370
    %v385 = vunpack.c.l.b16 %v371
    %v386 = vpack.c.b16 %v383, %v382
    %v387 = vpack.c.b16 %v385, %v384
    %v391 = vsel %vm95, %v372, 0
    %393 = vmatprep.subr.bf16.mxu0 0
    %394 = vmatpush1.bf16.msra.mxu0 %v386
    %395 = vmatprep.subr.bf16.mxu0 0
    %396 = vmatpush1.bf16.msra.mxu0 %v387
    %397 = vmatprep.subr.bf16.mxu0 0
    %398 = vmatpush1.bf16.msra.mxu0 0
    %399 = vmatprep.subr.bf16.mxu0 0
    %400 = vmatpush1.bf16.msra.mxu0 0
    %401 = vmatprep.subr.bf16.mxu0 0
    %402 = vmatpush1.bf16.msra.mxu0 0
    %403 = vmatprep.subr.bf16.mxu0 0
    %404 = vmatpush1.bf16.msra.mxu0 0
    %405 = vmatprep.subr.bf16.mxu0 0
    %406 = vmatpush1.bf16.msra.mxu0 0
    %407 = vmatprep.subr.bf16.mxu0 0
    %408 = vmatpush1.bf16.msra.mxu0 0
    %409 = vmatprep.subr.bf16.mxu0 0
    %410 = vmatpush1.bf16.msra.mxu0 0
    %411 = vmatprep.subr.bf16.mxu0 0
    %412 = vmatpush1.bf16.msra.mxu0 0
    %413 = vmatprep.subr.bf16.mxu0 0
    %414 = vmatpush1.bf16.msra.mxu0 0
    %415 = vmatprep.subr.bf16.mxu0 0
    %416 = vmatpush1.bf16.msra.mxu0 0
    %417 = vmatprep.subr.bf16.mxu0 0
    %418 = vmatpush1.bf16.msra.mxu0 0
    %419 = vmatprep.subr.bf16.mxu0 0
    %420 = vmatpush1.bf16.msra.mxu0 0
    %421 = vmatprep.subr.bf16.mxu0 0
    %422 = vmatpush1.bf16.msra.mxu0 0
    %423 = vmatprep.subr.bf16.mxu0 0
    %424 = vmatpush1.bf16.msra.mxu0 0
    %425 = vmatprep.mubr.bf16.mxu0 0
    %426 = vmatmul.mubr.bf16.gmra.mrb[0].mxu0 %v391
    %v427 = vpop.f32.mrb[0].mxu0
    %v428 = vadd.f32 %v377, %v427
    %v429 = vpop.f32.mrb[0].mxu0
    %v430 = vpop.f32.mrb[0].mxu0
    %v431 = vpop.f32.mrb[0].mxu0
    %432 = vdwg.mxu0
    %v433 = vsel %vm95, %v428, 0.0
    %434 = vadd.xlane.f32.xlu0 %v433
    %v435 = vpop.xlane.xlu0 %434
    %v436 = vmul.f32 %v435, %v99
    %v437 = vmul.f32 %v428, %v428
    %v438 = vsel %vm95, %v437, 0.0
    %439 = vadd.xlane.f32.xlu0 %v438
    %v440 = vpop.xlane.xlu0 %439
    %v441 = vmul.f32 %v440, %v99
    %v442 = vmul.f32 %v436, %v436
    %v443 = vsub.f32 %v441, %v442
    %v444 = vsub.f32 %v428, %v436
    %v445 = vadd.f32 %v443, 1e-05
    %v446 = vrsqrt.pop %v445
    %v447 = vmul.f32 %v444, %v446
    %v448 = vld [vmem:[%s5 + $0xa] sm:$0x1]
    %v449 = vlaneseq
    %v450 = vshrl.u32 %v449, 7
    %v451 = vsub.s32 0, %v450
    %v452 = vrot.slane %v448, %v451
    %v453 = vmul.f32 %v447, %v452
    %v454 = vld [vmem:[%s5 + $0xb] sm:$0x1]
    %v455 = vlaneseq
    %v456 = vshrl.u32 %v455, 7
    %v457 = vsub.s32 0, %v456
    %v458 = vrot.slane %v454, %v457
    %v459 = vadd.f32 %v453, %v458
    %v460 = vmax.f32 %v459, 0.0
    %s461 = scalar_lea.vmem [#allocation2], 48
    %v462 = vld [vmem:[%s461] sm:$0xf]
    %v463 = vld [vmem:[%s461 + $0x4] sm:$0xf]
    %v464 = vld [vmem:[%s461 + $0x8] sm:$0xf]
    %v465 = vld [vmem:[%s461 + $0xc] sm:$0xf]
    %v466 = vpack.c.bf16 %v460, %v460
    %v467 = vld [vmem:[%s5 + $0xc] sm:$0x1]
    %v468 = vlaneseq
    %v469 = vshrl.u32 %v468, 7
    %v470 = vsub.s32 0, %v469
    %v471 = vrot.slane %v467, %v470
    %v476 = vunpack.c.l.b16 %v462
    %v477 = vunpack.c.l.b16 %v463
    %v478 = vunpack.c.l.b16 %v464
    %v479 = vunpack.c.l.b16 %v465
    %v480 = vpack.c.b16 %v477, %v476
    %v481 = vpack.c.b16 %v479, %v478
    %v485 = vsel %vm95, %v466, 0
    %487 = vmatprep.subr.bf16.mxu0 0
    %488 = vmatpush1.bf16.msra.mxu0 %v480
    %489 = vmatprep.subr.bf16.mxu0 0
    %490 = vmatpush1.bf16.msra.mxu0 %v481
    %491 = vmatprep.subr.bf16.mxu0 0
    %492 = vmatpush1.bf16.msra.mxu0 0
    %493 = vmatprep.subr.bf16.mxu0 0
    %494 = vmatpush1.bf16.msra.mxu0 0
    %495 = vmatprep.subr.bf16.mxu0 0
    %496 = vmatpush1.bf16.msra.mxu0 0
    %497 = vmatprep.subr.bf16.mxu0 0
    %498 = vmatpush1.bf16.msra.mxu0 0
    %499 = vmatprep.subr.bf16.mxu0 0
    %500 = vmatpush1.bf16.msra.mxu0 0
    %501 = vmatprep.subr.bf16.mxu0 0
    %502 = vmatpush1.bf16.msra.mxu0 0
    %503 = vmatprep.subr.bf16.mxu0 0
    %504 = vmatpush1.bf16.msra.mxu0 0
    %505 = vmatprep.subr.bf16.mxu0 0
    %506 = vmatpush1.bf16.msra.mxu0 0
    %507 = vmatprep.subr.bf16.mxu0 0
    %508 = vmatpush1.bf16.msra.mxu0 0
    %509 = vmatprep.subr.bf16.mxu0 0
    %510 = vmatpush1.bf16.msra.mxu0 0
    %511 = vmatprep.subr.bf16.mxu0 0
    %512 = vmatpush1.bf16.msra.mxu0 0
    %513 = vmatprep.subr.bf16.mxu0 0
    %514 = vmatpush1.bf16.msra.mxu0 0
    %515 = vmatprep.subr.bf16.mxu0 0
    %516 = vmatpush1.bf16.msra.mxu0 0
    %517 = vmatprep.subr.bf16.mxu0 0
    %518 = vmatpush1.bf16.msra.mxu0 0
    %519 = vmatprep.mubr.bf16.mxu0 0
    %520 = vmatmul.mubr.bf16.gmra.mrb[0].mxu0 %v485
    %v521 = vpop.f32.mrb[0].mxu0
    %v522 = vadd.f32 %v471, %v521
    %v523 = vpop.f32.mrb[0].mxu0
    %v524 = vpop.f32.mrb[0].mxu0
    %v525 = vpop.f32.mrb[0].mxu0
    %526 = vdwg.mxu0
    %v527 = vsel %vm95, %v522, 0.0
    %528 = vadd.xlane.f32.xlu0 %v527
    %v529 = vpop.xlane.xlu0 %528
    %v530 = vmul.f32 %v529, %v99
    %v531 = vmul.f32 %v522, %v522
    %v532 = vsel %vm95, %v531, 0.0
    %533 = vadd.xlane.f32.xlu0 %v532
    %v534 = vpop.xlane.xlu0 %533
    %v535 = vmul.f32 %v534, %v99
    %v536 = vmul.f32 %v530, %v530
    %v537 = vsub.f32 %v535, %v536
    %v538 = vsub.f32 %v522, %v530
    %v539 = vadd.f32 %v537, 1e-05
    %v540 = vrsqrt.pop %v539
    %v541 = vmul.f32 %v538, %v540
    %v542 = vld [vmem:[%s5 + $0xd] sm:$0x1]
    %v543 = vlaneseq
    %v544 = vshrl.u32 %v543, 7
    %v545 = vsub.s32 0, %v544
    %v546 = vrot.slane %v542, %v545
    %v547 = vmul.f32 %v541, %v546
    %v548 = vld [vmem:[%s5 + $0xe] sm:$0x1]
    %v549 = vlaneseq
    %v550 = vshrl.u32 %v549, 7
    %v551 = vsub.s32 0, %v550
    %v552 = vrot.slane %v548, %v551
    %v553 = vadd.f32 %v547, %v552
    %v554 = vmax.f32 %v553, 0.0
    %s555 = scalar_lea.vmem [#allocation2], 64
    %v556 = vld [vmem:[%s555] sm:$0xf]
    %v557 = vld [vmem:[%s555 + $0x4] sm:$0xf]
    %v558 = vld [vmem:[%s555 + $0x8] sm:$0xf]
    %v559 = vld [vmem:[%s555 + $0xc] sm:$0xf]
    %v560 = vpack.c.bf16 %v554, %v554
    %v561 = vld [vmem:[%s5 + $0xf] sm:$0x1]
    %v562 = vlaneseq
    %v563 = vshrl.u32 %v562, 7
    %v564 = vsub.s32 0, %v563
    %v565 = vrot.slane %v561, %v564
    %v570 = vunpack.c.l.b16 %v556
    %v571 = vunpack.c.l.b16 %v557
    %v572 = vunpack.c.l.b16 %v558
    %v573 = vunpack.c.l.b16 %v559
    %v574 = vpack.c.b16 %v571, %v570
    %v575 = vpack.c.b16 %v573, %v572
    %v579 = vsel %vm95, %v560, 0
    %581 = vmatprep.subr.bf16.mxu0 0
    %582 = vmatpush1.bf16.msra.mxu0 %v574
    %583 = vmatprep.subr.bf16.mxu0 0
    %584 = vmatpush1.bf16.msra.mxu0 %v575
    %585 = vmatprep.subr.bf16.mxu0 0
    %586 = vmatpush1.bf16.msra.mxu0 0
    %587 = vmatprep.subr.bf16.mxu0 0
    %588 = vmatpush1.bf16.msra.mxu0 0
    %589 = vmatprep.subr.bf16.mxu0 0
    %590 = vmatpush1.bf16.msra.mxu0 0
    %591 = vmatprep.subr.bf16.mxu0 0
    %592 = vmatpush1.bf16.msra.mxu0 0
    %593 = vmatprep.subr.bf16.mxu0 0
    %594 = vmatpush1.bf16.msra.mxu0 0
    %595 = vmatprep.subr.bf16.mxu0 0
    %596 = vmatpush1.bf16.msra.mxu0 0
    %597 = vmatprep.subr.bf16.mxu0 0
    %598 = vmatpush1.bf16.msra.mxu0 0
    %599 = vmatprep.subr.bf16.mxu0 0
    %600 = vmatpush1.bf16.msra.mxu0 0
    %601 = vmatprep.subr.bf16.mxu0 0
    %602 = vmatpush1.bf16.msra.mxu0 0
    %603 = vmatprep.subr.bf16.mxu0 0
    %604 = vmatpush1.bf16.msra.mxu0 0
    %605 = vmatprep.subr.bf16.mxu0 0
    %606 = vmatpush1.bf16.msra.mxu0 0
    %607 = vmatprep.subr.bf16.mxu0 0
    %608 = vmatpush1.bf16.msra.mxu0 0
    %609 = vmatprep.subr.bf16.mxu0 0
    %610 = vmatpush1.bf16.msra.mxu0 0
    %611 = vmatprep.subr.bf16.mxu0 0
    %612 = vmatpush1.bf16.msra.mxu0 0
    %613 = vmatprep.mubr.bf16.mxu0 0
    %614 = vmatmul.mubr.bf16.gmra.mrb[0].mxu0 %v579
    %v615 = vpop.f32.mrb[0].mxu0
    %v616 = vadd.f32 %v565, %v615
    %v617 = vpop.f32.mrb[0].mxu0
    %v618 = vpop.f32.mrb[0].mxu0
    %v619 = vpop.f32.mrb[0].mxu0
    %620 = vdwg.mxu0
    %621 = vst.msk [vmem:[#allocation5] sm:$0xff] %vm95, %v616
    // Predicated region
    $region30: #{tpu_custom_call.1} parent=1 // pred_check
      _
    $region31: #{tpu_custom_call.1} parent=1 // pred_check_branch
      %623 = sbr.rel (0) target = $region33
    $region32: #{tpu_custom_call.1} parent=1 // pred_region
      %s625 = ssub.s32 128, 128
      %626 = vsyncadd [#allocation4], %s625
      %s628 = sshll.u32 [#allocation5], 4
      %s629 = int_to_ptr.vmem [resolvable:$true] %s628
      %631 = dma.vmem_to_hbm [thread:$0]  %s629, 128, %s6, [#allocation4]
    $region33: #{tpu_custom_call.1} parent=1 // pred_fallthru
      _
    // Predicated region
    $region34: #{tpu_custom_call.1} parent=1 // pred_check
      _
    $region35: #{tpu_custom_call.1} parent=1 // pred_check_branch
      %633 = sbr.rel (0) target = $region37
    $region36: #{tpu_custom_call.1} parent=1 // pred_region
      %634 = dma.done [#allocation4], 128
    $region37: #{tpu_custom_call.1} parent=1 // pred_fallthru
      _
    %635 = vsyncpa [#allocation3], 1
    %636 = vsyncpa [#allocation4], 1

</llo_original>
